<compile_context>
chip_gen: v7x
topology: tpu7x:2x2x1
jax: 0.10.0
libtpu: 0.0.40
codegen_flags: <defaults>
</compile_context>

<pallas_src>
import jax
import jax.numpy as jnp
import numpy as np
from jax import lax
from jax.experimental import pallas as pl
from jax.experimental.pallas import tpu as pltpu

# -------------------- model dims (module defaults, small vocab/batch/seq) -------------
V = 64     # vocab_size
E = 30     # emb_size
H = 10     # hidden_size
B = 2      # batch
S = 8      # seq length

Hp = 128          # hidden size padded to a full lane width
G = 4 * Hp        # fused gate width; gate k lives in lanes [k*Hp, k*Hp + H)
Vp = 128          # vocab padded to a full lane width (lane-dense output store)
Vr = 128          # vocab rows of the projection table padded to a full lane width
Bp = 8            # batch padded to a full sublane width (unmasked loads/stores)


# -------------------- Pallas kernel ----------------------------------------------------
def lang_kernel(ids_ref,   # VMEM (S*Bp, 1) int32  token ids, time-major flattened (t*Bp + b)
                tab_ref,   # VMEM (Vr, G)          emb @ W_ih + (b_ih + b_hh), vocab-row padded
                whh_ref,   # VMEM (Hp, G)          fused hidden->gate weights (zero padded)
                wfc_ref,   # VMEM (Hp, Vp)         fc3 weight^T (zero padded)
                bfc_ref,   # VMEM (1, Vp)          fc3 bias (zero padded)
                out_ref,   # VMEM (Bp, Vp)         padded logits
                xg_scr):   # VMEM (S*Bp, G) scratch: per-token gate pre-activations
    # ---- 1. embedding + input projection gather as ONE one-hot MXU matmul -------------
    # (x_emb @ W_ih + b)[t, b] == onehot(ids[t, b]) @ (emb @ W_ih + b); the table is
    # precomputed on the host, so the whole gather is a single (S*Bp, Vr) @ (Vr, G) dot.
    ids = ids_ref[...]                                            # (S*Bp, 1) int32
    iota = lax.broadcasted_iota(jnp.int32, (S * Bp, Vr), 1)       # (S*Bp, Vr)
    onehot = (iota == ids).astype(jnp.float32)                    # lane-broadcast compare
    xg_scr[...] = jnp.dot(onehot, tab_ref[...],
                          preferred_element_type=jnp.float32)     # (S*Bp, G)

    # ---- 2. LSTM recurrence: statically unrolled, h/c carried in full (8,128) vregs ---
    h = jnp.zeros((Bp, Hp), jnp.float32)
    c = jnp.zeros((Bp, Hp), jnp.float32)
    for t in range(S):
        # static, tile-aligned (Bp, G) slice of the scratch + one MXU dot per step
        g = xg_scr[t * Bp:(t + 1) * Bp, :] + jnp.dot(
            h, whh_ref[...], preferred_element_type=jnp.float32)
        i_g = jax.nn.sigmoid(g[:, 0 * Hp:1 * Hp])   # 128-lane aligned slices: free
        f_g = jax.nn.sigmoid(g[:, 1 * Hp:2 * Hp])
        g_g = jnp.tanh(g[:, 2 * Hp:3 * Hp])
        o_g = jax.nn.sigmoid(g[:, 3 * Hp:4 * Hp])
        c = f_g * c + i_g * g_g
        h = o_g * jnp.tanh(c)

    # dropout(h_n): eval-mode identity.
    # TODO(synk): training-mode dropout (p=0.9 Bernoulli mask + 1/(1-p) scale) omitted.

    # ---- 3. fc3 on the final hidden state: lane- and sublane-dense (8,128) store ------
    out_ref[...] = (jnp.dot(h, wfc_ref[...], preferred_element_type=jnp.float32)
                    + bfc_ref[...])


# -------------------- parameter prep (done once, outside the hot path) -----------------
def prep_params(params):
    """PyTorch layout -> fused, 128-lane-padded kernel layout. Gate order [i, f, g, o].

    NOTE (pad-lane inertness): pad lanes of the table/biases, pad columns of whh, and the
    zero h0/c0 keep all pad hidden lanes exactly 0 through the recurrence (sigmoid(0)*0).
    If any of that padding changes, pad lanes would leak into real lanes via the fused dot.
    """
    f32 = jnp.float32
    # weight_ih: (4H, E) -> (E, 4, H) -> pad H->Hp -> (E, 4*Hp)
    wih = params["w_ih"].astype(f32).reshape(4, H, E).transpose(2, 0, 1)
    wih = jnp.pad(wih, ((0, 0), (0, 0), (0, Hp - H))).reshape(E, G)
    # combined bias, zero padded
    b = (params["b_ih"] + params["b_hh"]).astype(f32).reshape(4, H)
    b = jnp.pad(b, ((0, 0), (0, Hp - H))).reshape(1, G)
    # precomputed input projection table over the whole vocab, vocab rows padded to Vr
    table = params["emb"].astype(f32) @ wih + b                   # (V, G)
    table = jnp.pad(table, ((0, Vr - V), (0, 0)))                 # (Vr, G)
    # weight_hh: (4H, H) -> (H_in, 4, H_out) -> pad both H dims -> (Hp, 4*Hp)
    whh = params["w_hh"].astype(f32).reshape(4, H, H).transpose(2, 0, 1)
    whh = jnp.pad(whh, ((0, Hp - H), (0, 0), (0, Hp - H))).reshape(Hp, G)
    # fc3: weight (V, H) -> (Hp, Vp); bias (V,) -> (1, Vp)
    wfc = jnp.pad(params["w_fc"].astype(f32).T, ((0, Hp - H), (0, Vp - V)))
    bfc = jnp.pad(params["b_fc"].astype(f32), (0, Vp - V)).reshape(1, Vp)
    return table, whh, wfc, bfc


@jax.jit
def lang_model_forward(token_ids, prepped):
    """token_ids: (B, S) int -> logits (B, V) float32 (the .double() is host-side)."""
    table, whh, wfc, bfc = prepped
    # pad batch to 8 sublanes and flatten time-major: ids_flat[t*Bp + b] = token_ids[b, t]
    ids_pad = jnp.zeros((Bp, S), jnp.int32).at[:B, :].set(token_ids.astype(jnp.int32))
    ids_flat = ids_pad.T.reshape(S * Bp, 1)

    vmem = pl.BlockSpec(memory_space=pltpu.MemorySpace.VMEM)
    logits_padded = pl.pallas_call(
        lang_kernel,
        out_shape=jax.ShapeDtypeStruct((Bp, Vp), jnp.float32),
        in_specs=[vmem, vmem, vmem, vmem, vmem],
        out_specs=vmem,
        scratch_shapes=[
            pltpu.VMEM((S * Bp, G), jnp.float32),   # per-token gate pre-activations
        ],
    )(ids_flat, table, whh, wfc, bfc)
    # drop sublane/lane padding; .squeeze() is a no-op for B > 1
    return logits_padded[:B, :V]


# -------------------- deterministic parameter init -------------------------------------
def init_params(key):
    ks = jax.random.split(key, 7)
    scale = 0.1
    return {
        "emb":  (scale * jax.random.normal(ks[0], (V, E))).astype(jnp.float32),
        "w_ih": (scale * jax.random.normal(ks[1], (4 * H, E))).astype(jnp.float32),
        "w_hh": (scale * jax.random.normal(ks[2], (4 * H, H))).astype(jnp.float32),
        "b_ih": (scale * jax.random.normal(ks[3], (4 * H,))).astype(jnp.float32),
        "b_hh": (scale * jax.random.normal(ks[4], (4 * H,))).astype(jnp.float32),
        "w_fc": (scale * jax.random.normal(ks[5], (V, H))).astype(jnp.float32),
        "b_fc": (scale * jax.random.normal(ks[6], (V,))).astype(jnp.float32),
    }


if __name__ == "__main__":
    key = jax.random.PRNGKey(0)
    pkey, xkey = jax.random.split(key)
    params = init_params(pkey)
    prepped = prep_params(params)                      # one-time weight re-layout + fold
    token_ids = jax.random.randint(xkey, (B, S), 0, V, dtype=jnp.int32)

    logits_f32 = lang_model_forward(token_ids, prepped)
    logits_f32 = jax.block_until_ready(logits_f32)

    # .double(): host-side cast — TPU has no native f64 and the compute is f32 anyway,
    # so values match an on-device emulated-f64 cast without the extra XLA op.
    logits = np.asarray(logits_f32, dtype=np.float64)

    assert logits.shape == (B, V), logits.shape
    assert logits.dtype == np.float64, logits.dtype
    assert np.all(np.isfinite(logits))
    print("KERNEL_OK")
</pallas_src>

<mosaic_0001>
module attributes {stable_mosaic.version = 11 : i64} {
  func.func @lang_kernel(%arg0: memref<64x1xi32, #tpu.memory_space<vmem>>, %arg1: memref<128x512xf32, #tpu.memory_space<vmem>>, %arg2: memref<128x512xf32, #tpu.memory_space<vmem>>, %arg3: memref<128x128xf32, #tpu.memory_space<vmem>>, %arg4: memref<1x128xf32, #tpu.memory_space<vmem>>, %arg5: memref<8x128xf32, #tpu.memory_space<vmem>>, %arg6: memref<64x512xf32, #tpu.memory_space<vmem>>) attributes {dimension_semantics = [], scalar_prefetch = 0 : i64, scratch_operands = 1 : i64, tpu.core_type = #tpu.core_type<tc>} {
    %c0 = arith.constant 0 : index
    %c0_0 = arith.constant 0 : index
    %0 = vector.load %arg0[%c0, %c0_0] : memref<64x1xi32, #tpu.memory_space<vmem>>, vector<64x1xi32>
    %1 = tpu.iota {dimensions = array<i32: 1>} : vector<64x128xi32>
    %2 = vector.broadcast %0 : vector<64x1xi32> to vector<64x128xi32>
    %3 = arith.cmpi eq, %1, %2 : vector<64x128xi32>
    %4 = arith.extui %3 : vector<64x128xi1> to vector<64x128xi32>
    %5 = arith.sitofp %4 : vector<64x128xi32> to vector<64x128xf32>
    %c0_1 = arith.constant 0 : index
    %c0_2 = arith.constant 0 : index
    %6 = vector.load %arg1[%c0_1, %c0_2] : memref<128x512xf32, #tpu.memory_space<vmem>>, vector<128x512xf32>
    %cst = arith.constant dense<0.000000e+00> : vector<64x512xf32>
    %7 = tpu.matmul %5, %6, %cst {dimension_numbers = #tpu.dot_dimension_numbers<[1], [0], [0], [1], [0, 0, 1, 1], [], []>} : vector<64x128xf32>, vector<128x512xf32>, vector<64x512xf32> -> vector<64x512xf32>
    %c0_3 = arith.constant 0 : index
    %c0_4 = arith.constant 0 : index
    %8 = vector.load %arg6[%c0_3, %c0_4] : memref<64x512xf32, #tpu.memory_space<vmem>>, vector<64x512xf32>
    tpu.vector_store %arg6[%c0_3, %c0_4], %7 {strides = array<i32>} : memref<64x512xf32, #tpu.memory_space<vmem>>, vector<64x512xf32>,
    %cst_5 = arith.constant 0.000000e+00 : f32
    %9 = vector.broadcast %cst_5 : f32 to vector<8x128xf32>
    %cst_6 = arith.constant 0.000000e+00 : f32
    %10 = vector.broadcast %cst_6 : f32 to vector<8x128xf32>
    %c0_7 = arith.constant 0 : index
    %c0_8 = arith.constant 0 : index
    %11 = vector.load %arg6[%c0_7, %c0_8] : memref<64x512xf32, #tpu.memory_space<vmem>>, vector<8x512xf32>
    %c0_9 = arith.constant 0 : index
    %c0_10 = arith.constant 0 : index
    %12 = vector.load %arg2[%c0_9, %c0_10] : memref<128x512xf32, #tpu.memory_space<vmem>>, vector<128x512xf32>
    %cst_11 = arith.constant dense<0.000000e+00> : vector<8x512xf32>
    %13 = tpu.matmul %9, %12, %cst_11 {dimension_numbers = #tpu.dot_dimension_numbers<[1], [0], [0], [1], [0, 0, 1, 1], [], []>} : vector<8x128xf32>, vector<128x512xf32>, vector<8x512xf32> -> vector<8x512xf32>
    %14 = arith.addf %11, %13 : vector<8x512xf32>
    %15 = vector.extract_strided_slice %14 {offsets = [0, 0], sizes = [8, 128], strides = [1, 1]} : vector<8x512xf32> to vector<8x128xf32>
    %16 = arith.negf %15 : vector<8x128xf32>
    %17 = math.exp %16 : vector<8x128xf32>
    %cst_12 = arith.constant 1.000000e+00 : f32
    %18 = vector.broadcast %cst_12 : f32 to vector<8x128xf32>
    %19 = arith.addf %18, %17 : vector<8x128xf32>
    %20 = arith.divf %18, %19 : vector<8x128xf32>
    %21 = vector.extract_strided_slice %14 {offsets = [0, 128], sizes = [8, 128], strides = [1, 1]} : vector<8x512xf32> to vector<8x128xf32>
    %22 = arith.negf %21 : vector<8x128xf32>
    %23 = math.exp %22 : vector<8x128xf32>
    %cst_13 = arith.constant 1.000000e+00 : f32
    %24 = vector.broadcast %cst_13 : f32 to vector<8x128xf32>
    %25 = arith.addf %24, %23 : vector<8x128xf32>
    %26 = arith.divf %24, %25 : vector<8x128xf32>
    %27 = vector.extract_strided_slice %14 {offsets = [0, 256], sizes = [8, 128], strides = [1, 1]} : vector<8x512xf32> to vector<8x128xf32>
    %28 = math.tanh %27 : vector<8x128xf32>
    %29 = vector.extract_strided_slice %14 {offsets = [0, 384], sizes = [8, 128], strides = [1, 1]} : vector<8x512xf32> to vector<8x128xf32>
    %30 = arith.negf %29 : vector<8x128xf32>
    %31 = math.exp %30 : vector<8x128xf32>
    %cst_14 = arith.constant 1.000000e+00 : f32
    %32 = vector.broadcast %cst_14 : f32 to vector<8x128xf32>
    %33 = arith.addf %32, %31 : vector<8x128xf32>
    %34 = arith.divf %32, %33 : vector<8x128xf32>
    %35 = arith.mulf %26, %10 : vector<8x128xf32>
    %36 = arith.mulf %20, %28 : vector<8x128xf32>
    %37 = arith.addf %35, %36 : vector<8x128xf32>
    %38 = math.tanh %37 : vector<8x128xf32>
    %39 = arith.mulf %34, %38 : vector<8x128xf32>
    %c8 = arith.constant 8 : index
    %c0_15 = arith.constant 0 : index
    %40 = vector.load %arg6[%c8, %c0_15] : memref<64x512xf32, #tpu.memory_space<vmem>>, vector<8x512xf32>
    %c0_16 = arith.constant 0 : index
    %c0_17 = arith.constant 0 : index
    %41 = vector.load %arg2[%c0_16, %c0_17] : memref<128x512xf32, #tpu.memory_space<vmem>>, vector<128x512xf32>
    %cst_18 = arith.constant dense<0.000000e+00> : vector<8x512xf32>
    %42 = tpu.matmul %39, %41, %cst_18 {dimension_numbers = #tpu.dot_dimension_numbers<[1], [0], [0], [1], [0, 0, 1, 1], [], []>} : vector<8x128xf32>, vector<128x512xf32>, vector<8x512xf32> -> vector<8x512xf32>
    %43 = arith.addf %40, %42 : vector<8x512xf32>
    %44 = vector.extract_strided_slice %43 {offsets = [0, 0], sizes = [8, 128], strides = [1, 1]} : vector<8x512xf32> to vector<8x128xf32>
    %45 = arith.negf %44 : vector<8x128xf32>
    %46 = math.exp %45 : vector<8x128xf32>
    %cst_19 = arith.constant 1.000000e+00 : f32
    %47 = vector.broadcast %cst_19 : f32 to vector<8x128xf32>
    %48 = arith.addf %47, %46 : vector<8x128xf32>
    %49 = arith.divf %47, %48 : vector<8x128xf32>
    %50 = vector.extract_strided_slice %43 {offsets = [0, 128], sizes = [8, 128], strides = [1, 1]} : vector<8x512xf32> to vector<8x128xf32>
    %51 = arith.negf %50 : vector<8x128xf32>
    %52 = math.exp %51 : vector<8x128xf32>
    %cst_20 = arith.constant 1.000000e+00 : f32
    %53 = vector.broadcast %cst_20 : f32 to vector<8x128xf32>
    %54 = arith.addf %53, %52 : vector<8x128xf32>
    %55 = arith.divf %53, %54 : vector<8x128xf32>
    %56 = vector.extract_strided_slice %43 {offsets = [0, 256], sizes = [8, 128], strides = [1, 1]} : vector<8x512xf32> to vector<8x128xf32>
    %57 = math.tanh %56 : vector<8x128xf32>
    %58 = vector.extract_strided_slice %43 {offsets = [0, 384], sizes = [8, 128], strides = [1, 1]} : vector<8x512xf32> to vector<8x128xf32>
    %59 = arith.negf %58 : vector<8x128xf32>
    %60 = math.exp %59 : vector<8x128xf32>
    %cst_21 = arith.constant 1.000000e+00 : f32
    %61 = vector.broadcast %cst_21 : f32 to vector<8x128xf32>
    %62 = arith.addf %61, %60 : vector<8x128xf32>
    %63 = arith.divf %61, %62 : vector<8x128xf32>
    %64 = arith.mulf %55, %37 : vector<8x128xf32>
    %65 = arith.mulf %49, %57 : vector<8x128xf32>
    %66 = arith.addf %64, %65 : vector<8x128xf32>
    %67 = math.tanh %66 : vector<8x128xf32>
    %68 = arith.mulf %63, %67 : vector<8x128xf32>
    %c16 = arith.constant 16 : index
    %c0_22 = arith.constant 0 : index
    %69 = vector.load %arg6[%c16, %c0_22] : memref<64x512xf32, #tpu.memory_space<vmem>>, vector<8x512xf32>
    %c0_23 = arith.constant 0 : index
    %c0_24 = arith.constant 0 : index
    %70 = vector.load %arg2[%c0_23, %c0_24] : memref<128x512xf32, #tpu.memory_space<vmem>>, vector<128x512xf32>
    %cst_25 = arith.constant dense<0.000000e+00> : vector<8x512xf32>
    %71 = tpu.matmul %68, %70, %cst_25 {dimension_numbers = #tpu.dot_dimension_numbers<[1], [0], [0], [1], [0, 0, 1, 1], [], []>} : vector<8x128xf32>, vector<128x512xf32>, vector<8x512xf32> -> vector<8x512xf32>
    %72 = arith.addf %69, %71 : vector<8x512xf32>
    %73 = vector.extract_strided_slice %72 {offsets = [0, 0], sizes = [8, 128], strides = [1, 1]} : vector<8x512xf32> to vector<8x128xf32>
    %74 = arith.negf %73 : vector<8x128xf32>
    %75 = math.exp %74 : vector<8x128xf32>
    %cst_26 = arith.constant 1.000000e+00 : f32
    %76 = vector.broadcast %cst_26 : f32 to vector<8x128xf32>
    %77 = arith.addf %76, %75 : vector<8x128xf32>
    %78 = arith.divf %76, %77 : vector<8x128xf32>
    %79 = vector.extract_strided_slice %72 {offsets = [0, 128], sizes = [8, 128], strides = [1, 1]} : vector<8x512xf32> to vector<8x128xf32>
    %80 = arith.negf %79 : vector<8x128xf32>
    %81 = math.exp %80 : vector<8x128xf32>
    %cst_27 = arith.constant 1.000000e+00 : f32
    %82 = vector.broadcast %cst_27 : f32 to vector<8x128xf32>
    %83 = arith.addf %82, %81 : vector<8x128xf32>
    %84 = arith.divf %82, %83 : vector<8x128xf32>
    %85 = vector.extract_strided_slice %72 {offsets = [0, 256], sizes = [8, 128], strides = [1, 1]} : vector<8x512xf32> to vector<8x128xf32>
    %86 = math.tanh %85 : vector<8x128xf32>
    %87 = vector.extract_strided_slice %72 {offsets = [0, 384], sizes = [8, 128], strides = [1, 1]} : vector<8x512xf32> to vector<8x128xf32>
    %88 = arith.negf %87 : vector<8x128xf32>
    %89 = math.exp %88 : vector<8x128xf32>
    %cst_28 = arith.constant 1.000000e+00 : f32
    %90 = vector.broadcast %cst_28 : f32 to vector<8x128xf32>
    %91 = arith.addf %90, %89 : vector<8x128xf32>
    %92 = arith.divf %90, %91 : vector<8x128xf32>
    %93 = arith.mulf %84, %66 : vector<8x128xf32>
    %94 = arith.mulf %78, %86 : vector<8x128xf32>
    %95 = arith.addf %93, %94 : vector<8x128xf32>
    %96 = math.tanh %95 : vector<8x128xf32>
    %97 = arith.mulf %92, %96 : vector<8x128xf32>
    %c24 = arith.constant 24 : index
    %c0_29 = arith.constant 0 : index
    %98 = vector.load %arg6[%c24, %c0_29] : memref<64x512xf32, #tpu.memory_space<vmem>>, vector<8x512xf32>
    %c0_30 = arith.constant 0 : index
    %c0_31 = arith.constant 0 : index
    %99 = vector.load %arg2[%c0_30, %c0_31] : memref<128x512xf32, #tpu.memory_space<vmem>>, vector<128x512xf32>
    %cst_32 = arith.constant dense<0.000000e+00> : vector<8x512xf32>
    %100 = tpu.matmul %97, %99, %cst_32 {dimension_numbers = #tpu.dot_dimension_numbers<[1], [0], [0], [1], [0, 0, 1, 1], [], []>} : vector<8x128xf32>, vector<128x512xf32>, vector<8x512xf32> -> vector<8x512xf32>
    %101 = arith.addf %98, %100 : vector<8x512xf32>
    %102 = vector.extract_strided_slice %101 {offsets = [0, 0], sizes = [8, 128], strides = [1, 1]} : vector<8x512xf32> to vector<8x128xf32>
    %103 = arith.negf %102 : vector<8x128xf32>
    %104 = math.exp %103 : vector<8x128xf32>
    %cst_33 = arith.constant 1.000000e+00 : f32
    %105 = vector.broadcast %cst_33 : f32 to vector<8x128xf32>
    %106 = arith.addf %105, %104 : vector<8x128xf32>
    %107 = arith.divf %105, %106 : vector<8x128xf32>
    %108 = vector.extract_strided_slice %101 {offsets = [0, 128], sizes = [8, 128], strides = [1, 1]} : vector<8x512xf32> to vector<8x128xf32>
    %109 = arith.negf %108 : vector<8x128xf32>
    %110 = math.exp %109 : vector<8x128xf32>
    %cst_34 = arith.constant 1.000000e+00 : f32
    %111 = vector.broadcast %cst_34 : f32 to vector<8x128xf32>
    %112 = arith.addf %111, %110 : vector<8x128xf32>
    %113 = arith.divf %111, %112 : vector<8x128xf32>
    %114 = vector.extract_strided_slice %101 {offsets = [0, 256], sizes = [8, 128], strides = [1, 1]} : vector<8x512xf32> to vector<8x128xf32>
    %115 = math.tanh %114 : vector<8x128xf32>
    %116 = vector.extract_strided_slice %101 {offsets = [0, 384], sizes = [8, 128], strides = [1, 1]} : vector<8x512xf32> to vector<8x128xf32>
    %117 = arith.negf %116 : vector<8x128xf32>
    %118 = math.exp %117 : vector<8x128xf32>
    %cst_35 = arith.constant 1.000000e+00 : f32
    %119 = vector.broadcast %cst_35 : f32 to vector<8x128xf32>
    %120 = arith.addf %119, %118 : vector<8x128xf32>
    %121 = arith.divf %119, %120 : vector<8x128xf32>
    %122 = arith.mulf %113, %95 : vector<8x128xf32>
    %123 = arith.mulf %107, %115 : vector<8x128xf32>
    %124 = arith.addf %122, %123 : vector<8x128xf32>
    %125 = math.tanh %124 : vector<8x128xf32>
    %126 = arith.mulf %121, %125 : vector<8x128xf32>
    %c32 = arith.constant 32 : index
    %c0_36 = arith.constant 0 : index
    %127 = vector.load %arg6[%c32, %c0_36] : memref<64x512xf32, #tpu.memory_space<vmem>>, vector<8x512xf32>
    %c0_37 = arith.constant 0 : index
    %c0_38 = arith.constant 0 : index
    %128 = vector.load %arg2[%c0_37, %c0_38] : memref<128x512xf32, #tpu.memory_space<vmem>>, vector<128x512xf32>
    %cst_39 = arith.constant dense<0.000000e+00> : vector<8x512xf32>
    %129 = tpu.matmul %126, %128, %cst_39 {dimension_numbers = #tpu.dot_dimension_numbers<[1], [0], [0], [1], [0, 0, 1, 1], [], []>} : vector<8x128xf32>, vector<128x512xf32>, vector<8x512xf32> -> vector<8x512xf32>
    %130 = arith.addf %127, %129 : vector<8x512xf32>
    %131 = vector.extract_strided_slice %130 {offsets = [0, 0], sizes = [8, 128], strides = [1, 1]} : vector<8x512xf32> to vector<8x128xf32>
    %132 = arith.negf %131 : vector<8x128xf32>
    %133 = math.exp %132 : vector<8x128xf32>
    %cst_40 = arith.constant 1.000000e+00 : f32
    %134 = vector.broadcast %cst_40 : f32 to vector<8x128xf32>
    %135 = arith.addf %134, %133 : vector<8x128xf32>
    %136 = arith.divf %134, %135 : vector<8x128xf32>
    %137 = vector.extract_strided_slice %130 {offsets = [0, 128], sizes = [8, 128], strides = [1, 1]} : vector<8x512xf32> to vector<8x128xf32>
    %138 = arith.negf %137 : vector<8x128xf32>
    %139 = math.exp %138 : vector<8x128xf32>
    %cst_41 = arith.constant 1.000000e+00 : f32
    %140 = vector.broadcast %cst_41 : f32 to vector<8x128xf32>
    %141 = arith.addf %140, %139 : vector<8x128xf32>
    %142 = arith.divf %140, %141 : vector<8x128xf32>
    %143 = vector.extract_strided_slice %130 {offsets = [0, 256], sizes = [8, 128], strides = [1, 1]} : vector<8x512xf32> to vector<8x128xf32>
    %144 = math.tanh %143 : vector<8x128xf32>
    %145 = vector.extract_strided_slice %130 {offsets = [0, 384], sizes = [8, 128], strides = [1, 1]} : vector<8x512xf32> to vector<8x128xf32>
    %146 = arith.negf %145 : vector<8x128xf32>
    %147 = math.exp %146 : vector<8x128xf32>
    %cst_42 = arith.constant 1.000000e+00 : f32
    %148 = vector.broadcast %cst_42 : f32 to vector<8x128xf32>
    %149 = arith.addf %148, %147 : vector<8x128xf32>
    %150 = arith.divf %148, %149 : vector<8x128xf32>
    %151 = arith.mulf %142, %124 : vector<8x128xf32>
    %152 = arith.mulf %136, %144 : vector<8x128xf32>
    %153 = arith.addf %151, %152 : vector<8x128xf32>
    %154 = math.tanh %153 : vector<8x128xf32>
    %155 = arith.mulf %150, %154 : vector<8x128xf32>
    %c40 = arith.constant 40 : index
    %c0_43 = arith.constant 0 : index
    %156 = vector.load %arg6[%c40, %c0_43] : memref<64x512xf32, #tpu.memory_space<vmem>>, vector<8x512xf32>
    %c0_44 = arith.constant 0 : index
    %c0_45 = arith.constant 0 : index
    %157 = vector.load %arg2[%c0_44, %c0_45] : memref<128x512xf32, #tpu.memory_space<vmem>>, vector<128x512xf32>
    %cst_46 = arith.constant dense<0.000000e+00> : vector<8x512xf32>
    %158 = tpu.matmul %155, %157, %cst_46 {dimension_numbers = #tpu.dot_dimension_numbers<[1], [0], [0], [1], [0, 0, 1, 1], [], []>} : vector<8x128xf32>, vector<128x512xf32>, vector<8x512xf32> -> vector<8x512xf32>
    %159 = arith.addf %156, %158 : vector<8x512xf32>
    %160 = vector.extract_strided_slice %159 {offsets = [0, 0], sizes = [8, 128], strides = [1, 1]} : vector<8x512xf32> to vector<8x128xf32>
    %161 = arith.negf %160 : vector<8x128xf32>
    %162 = math.exp %161 : vector<8x128xf32>
    %cst_47 = arith.constant 1.000000e+00 : f32
    %163 = vector.broadcast %cst_47 : f32 to vector<8x128xf32>
    %164 = arith.addf %163, %162 : vector<8x128xf32>
    %165 = arith.divf %163, %164 : vector<8x128xf32>
    %166 = vector.extract_strided_slice %159 {offsets = [0, 128], sizes = [8, 128], strides = [1, 1]} : vector<8x512xf32> to vector<8x128xf32>
    %167 = arith.negf %166 : vector<8x128xf32>
    %168 = math.exp %167 : vector<8x128xf32>
    %cst_48 = arith.constant 1.000000e+00 : f32
    %169 = vector.broadcast %cst_48 : f32 to vector<8x128xf32>
    %170 = arith.addf %169, %168 : vector<8x128xf32>
    %171 = arith.divf %169, %170 : vector<8x128xf32>
    %172 = vector.extract_strided_slice %159 {offsets = [0, 256], sizes = [8, 128], strides = [1, 1]} : vector<8x512xf32> to vector<8x128xf32>
    %173 = math.tanh %172 : vector<8x128xf32>
    %174 = vector.extract_strided_slice %159 {offsets = [0, 384], sizes = [8, 128], strides = [1, 1]} : vector<8x512xf32> to vector<8x128xf32>
    %175 = arith.negf %174 : vector<8x128xf32>
    %176 = math.exp %175 : vector<8x128xf32>
    %cst_49 = arith.constant 1.000000e+00 : f32
    %177 = vector.broadcast %cst_49 : f32 to vector<8x128xf32>
    %178 = arith.addf %177, %176 : vector<8x128xf32>
    %179 = arith.divf %177, %178 : vector<8x128xf32>
    %180 = arith.mulf %171, %153 : vector<8x128xf32>
    %181 = arith.mulf %165, %173 : vector<8x128xf32>
    %182 = arith.addf %180, %181 : vector<8x128xf32>
    %183 = math.tanh %182 : vector<8x128xf32>
    %184 = arith.mulf %179, %183 : vector<8x128xf32>
    %c48 = arith.constant 48 : index
    %c0_50 = arith.constant 0 : index
    %185 = vector.load %arg6[%c48, %c0_50] : memref<64x512xf32, #tpu.memory_space<vmem>>, vector<8x512xf32>
    %c0_51 = arith.constant 0 : index
    %c0_52 = arith.constant 0 : index
    %186 = vector.load %arg2[%c0_51, %c0_52] : memref<128x512xf32, #tpu.memory_space<vmem>>, vector<128x512xf32>
    %cst_53 = arith.constant dense<0.000000e+00> : vector<8x512xf32>
    %187 = tpu.matmul %184, %186, %cst_53 {dimension_numbers = #tpu.dot_dimension_numbers<[1], [0], [0], [1], [0, 0, 1, 1], [], []>} : vector<8x128xf32>, vector<128x512xf32>, vector<8x512xf32> -> vector<8x512xf32>
    %188 = arith.addf %185, %187 : vector<8x512xf32>
    %189 = vector.extract_strided_slice %188 {offsets = [0, 0], sizes = [8, 128], strides = [1, 1]} : vector<8x512xf32> to vector<8x128xf32>
    %190 = arith.negf %189 : vector<8x128xf32>
    %191 = math.exp %190 : vector<8x128xf32>
    %cst_54 = arith.constant 1.000000e+00 : f32
    %192 = vector.broadcast %cst_54 : f32 to vector<8x128xf32>
    %193 = arith.addf %192, %191 : vector<8x128xf32>
    %194 = arith.divf %192, %193 : vector<8x128xf32>
    %195 = vector.extract_strided_slice %188 {offsets = [0, 128], sizes = [8, 128], strides = [1, 1]} : vector<8x512xf32> to vector<8x128xf32>
    %196 = arith.negf %195 : vector<8x128xf32>
    %197 = math.exp %196 : vector<8x128xf32>
    %cst_55 = arith.constant 1.000000e+00 : f32
    %198 = vector.broadcast %cst_55 : f32 to vector<8x128xf32>
    %199 = arith.addf %198, %197 : vector<8x128xf32>
    %200 = arith.divf %198, %199 : vector<8x128xf32>
    %201 = vector.extract_strided_slice %188 {offsets = [0, 256], sizes = [8, 128], strides = [1, 1]} : vector<8x512xf32> to vector<8x128xf32>
    %202 = math.tanh %201 : vector<8x128xf32>
    %203 = vector.extract_strided_slice %188 {offsets = [0, 384], sizes = [8, 128], strides = [1, 1]} : vector<8x512xf32> to vector<8x128xf32>
    %204 = arith.negf %203 : vector<8x128xf32>
    %205 = math.exp %204 : vector<8x128xf32>
    %cst_56 = arith.constant 1.000000e+00 : f32
    %206 = vector.broadcast %cst_56 : f32 to vector<8x128xf32>
    %207 = arith.addf %206, %205 : vector<8x128xf32>
    %208 = arith.divf %206, %207 : vector<8x128xf32>
    %209 = arith.mulf %200, %182 : vector<8x128xf32>
    %210 = arith.mulf %194, %202 : vector<8x128xf32>
    %211 = arith.addf %209, %210 : vector<8x128xf32>
    %212 = math.tanh %211 : vector<8x128xf32>
    %213 = arith.mulf %208, %212 : vector<8x128xf32>
    %c56 = arith.constant 56 : index
    %c0_57 = arith.constant 0 : index
    %214 = vector.load %arg6[%c56, %c0_57] : memref<64x512xf32, #tpu.memory_space<vmem>>, vector<8x512xf32>
    %c0_58 = arith.constant 0 : index
    %c0_59 = arith.constant 0 : index
    %215 = vector.load %arg2[%c0_58, %c0_59] : memref<128x512xf32, #tpu.memory_space<vmem>>, vector<128x512xf32>
    %cst_60 = arith.constant dense<0.000000e+00> : vector<8x512xf32>
    %216 = tpu.matmul %213, %215, %cst_60 {dimension_numbers = #tpu.dot_dimension_numbers<[1], [0], [0], [1], [0, 0, 1, 1], [], []>} : vector<8x128xf32>, vector<128x512xf32>, vector<8x512xf32> -> vector<8x512xf32>
    %217 = arith.addf %214, %216 : vector<8x512xf32>
    %218 = vector.extract_strided_slice %217 {offsets = [0, 0], sizes = [8, 128], strides = [1, 1]} : vector<8x512xf32> to vector<8x128xf32>
    %219 = arith.negf %218 : vector<8x128xf32>
    %220 = math.exp %219 : vector<8x128xf32>
    %cst_61 = arith.constant 1.000000e+00 : f32
    %221 = vector.broadcast %cst_61 : f32 to vector<8x128xf32>
    %222 = arith.addf %221, %220 : vector<8x128xf32>
    %223 = arith.divf %221, %222 : vector<8x128xf32>
    %224 = vector.extract_strided_slice %217 {offsets = [0, 128], sizes = [8, 128], strides = [1, 1]} : vector<8x512xf32> to vector<8x128xf32>
    %225 = arith.negf %224 : vector<8x128xf32>
    %226 = math.exp %225 : vector<8x128xf32>
    %cst_62 = arith.constant 1.000000e+00 : f32
    %227 = vector.broadcast %cst_62 : f32 to vector<8x128xf32>
    %228 = arith.addf %227, %226 : vector<8x128xf32>
    %229 = arith.divf %227, %228 : vector<8x128xf32>
    %230 = vector.extract_strided_slice %217 {offsets = [0, 256], sizes = [8, 128], strides = [1, 1]} : vector<8x512xf32> to vector<8x128xf32>
    %231 = math.tanh %230 : vector<8x128xf32>
    %232 = vector.extract_strided_slice %217 {offsets = [0, 384], sizes = [8, 128], strides = [1, 1]} : vector<8x512xf32> to vector<8x128xf32>
    %233 = arith.negf %232 : vector<8x128xf32>
    %234 = math.exp %233 : vector<8x128xf32>
    %cst_63 = arith.constant 1.000000e+00 : f32
    %235 = vector.broadcast %cst_63 : f32 to vector<8x128xf32>
    %236 = arith.addf %235, %234 : vector<8x128xf32>
    %237 = arith.divf %235, %236 : vector<8x128xf32>
    %238 = arith.mulf %229, %211 : vector<8x128xf32>
    %239 = arith.mulf %223, %231 : vector<8x128xf32>
    %240 = arith.addf %238, %239 : vector<8x128xf32>
    %241 = math.tanh %240 : vector<8x128xf32>
    %242 = arith.mulf %237, %241 : vector<8x128xf32>
    %c0_64 = arith.constant 0 : index
    %c0_65 = arith.constant 0 : index
    %243 = vector.load %arg3[%c0_64, %c0_65] : memref<128x128xf32, #tpu.memory_space<vmem>>, vector<128x128xf32>
    %cst_66 = arith.constant dense<0.000000e+00> : vector<8x128xf32>
    %244 = tpu.matmul %242, %243, %cst_66 {dimension_numbers = #tpu.dot_dimension_numbers<[1], [0], [0], [1], [0, 0, 1, 1], [], []>} : vector<8x128xf32>, vector<128x128xf32>, vector<8x128xf32> -> vector<8x128xf32>
    %c0_67 = arith.constant 0 : index
    %c0_68 = arith.constant 0 : index
    %245 = vector.load %arg4[%c0_67, %c0_68] : memref<1x128xf32, #tpu.memory_space<vmem>>, vector<1x128xf32>
    %246 = vector.broadcast %245 : vector<1x128xf32> to vector<8x128xf32>
    %247 = arith.addf %244, %246 : vector<8x128xf32>
    %c0_69 = arith.constant 0 : index
    %c0_70 = arith.constant 0 : index
    %248 = vector.load %arg5[%c0_69, %c0_70] : memref<8x128xf32, #tpu.memory_space<vmem>>, vector<8x128xf32>
    tpu.vector_store %arg5[%c0_69, %c0_70], %247 {strides = array<i32>} : memref<8x128xf32, #tpu.memory_space<vmem>>, vector<8x128xf32>,
    return
  }
}

</mosaic_0001>

<llo_original>
// kernel: lang_model_forward.1
$region0: #{lang_model_forward.1}
  #allocation0 [shape = 'u32[]', space=smem, size = 0x4, offset = 0x4, fixed_abs, tag = 'smem constant byte address 0x4 - core index']
  #allocation1 [shape = 'u32[144,128]{1,0:T(1,128)}', space=vmem, size = 0x12000, scoped, tag = 'internal scratch']
  #allocation2 [shape = 'f32[64,512]{1,0:T(8,128)}', space=vmem, size = 0x20000, scoped, tag = 'scratch operand']
  %s0 = inlined_call_operand.vmem [shape: s32[64,1], index: 0, kind: input, shape index: {}]
  %s1 = inlined_call_operand.hbm [shape: f32[128,512], index: 1, kind: input, shape index: {}]
  %s2 = inlined_call_operand.hbm [shape: f32[128,512], index: 2, kind: input, shape index: {}]
  %s3 = inlined_call_operand.hbm [shape: f32[128,128], index: 3, kind: input, shape index: {}]
  %s4 = inlined_call_operand.vmem [shape: f32[1,128], index: 4, kind: input, shape index: {}]
  %s5 = inlined_call_operand.vmem [shape: f32[8,128], index: 5, kind: output, shape index: {}]
  %s6 = sld [smem:[#allocation0]]
  $region42: #{lang_model_forward.1} parent=0
    _
  %s8 = ssub.s32 1, %s6
  %s9 = scalar_select 0, %s8, %s6
  $region1: #{lang_model_forward.1} parent=0
    #allocation3 [shape = 'u8[262144]{0}', space=vmem, size = 0x40000, scoped, tag = 'input window, operand 1, single buffered']
    #allocation4 [shape = 's32[1]{0}', space=sflag, size = 0x4, scoped, tag = 'scoped memory for lang_model_forward.1']
    #allocation5 [shape = 'u8[262144]{0}', space=vmem, size = 0x40000, scoped, tag = 'input window, operand 2, single buffered']
    #allocation6 [shape = 's32[1]{0}', space=sflag, size = 0x4, scoped, tag = 'scoped memory for lang_model_forward.1']
    #allocation7 [shape = 'u8[65536]{0}', space=vmem, size = 0x10000, scoped, tag = 'input window, operand 3, single buffered']
    %10 = vsyncpa [#allocation4], 0
    %11 = vsyncpa [#allocation6], 0
    // Predicated region
    $region2: #{lang_model_forward.1} parent=1 // pred_check
      _
    $region3: #{lang_model_forward.1} parent=1 // pred_check_branch
      %13 = sbr.rel (0) target = $region5
    $region4: #{lang_model_forward.1} parent=1 // pred_region
      _
    $region5: #{lang_model_forward.1} parent=1 // pred_fallthru
      _
    // Predicated region
    $region6: #{lang_model_forward.1} parent=1 // pred_check
      _
    $region7: #{lang_model_forward.1} parent=1 // pred_check_branch
      %15 = sbr.rel (0) target = $region9
    $region8: #{lang_model_forward.1} parent=1 // pred_region
      %s17 = ssub.s32 8192, 8192
      %18 = vsyncadd [#allocation4], %s17
      %s19 = sshll.u32 [#allocation3], 4
      %s20 = int_to_ptr.vmem [resolvable:$true] %s19
      %25 = dma.hbm_to_vmem [thread:$0]  %s1, 8192, %s20, [#allocation4], 512, 512, 32
    $region9: #{lang_model_forward.1} parent=1 // pred_fallthru
      _
    // Predicated region
    $region10: #{lang_model_forward.1} parent=1 // pred_check
      _
    $region11: #{lang_model_forward.1} parent=1 // pred_check_branch
      %27 = sbr.rel (0) target = $region13
    $region12: #{lang_model_forward.1} parent=1 // pred_region
      %s29 = ssub.s32 8192, 8192
      %30 = vsyncadd [#allocation6], %s29
      %s31 = sshll.u32 [#allocation5], 4
      %s32 = int_to_ptr.vmem [resolvable:$true] %s31
      %37 = dma.hbm_to_vmem [thread:$0]  %s2, 8192, %s32, [#allocation6], 512, 512, 32
    $region13: #{lang_model_forward.1} parent=1 // pred_fallthru
      _
    // Predicated region
    $region14: #{lang_model_forward.1} parent=1 // pred_check
      _
    $region15: #{lang_model_forward.1} parent=1 // pred_check_branch
      %39 = sbr.rel (0) target = $region17
    $region16: #{lang_model_forward.1} parent=1 // pred_region
      %s41 = ssub.s32 2048, 2048
      %42 = vsyncadd [#allocation6], %s41
      %s43 = sshll.u32 [#allocation7], 4
      %s44 = int_to_ptr.vmem [resolvable:$true] %s43
      %49 = dma.hbm_to_vmem [thread:$0]  %s3, 2048, %s44, [#allocation6], 128, 128, 8
    $region17: #{lang_model_forward.1} parent=1 // pred_fallthru
      _
    // Predicated region
    $region18: #{lang_model_forward.1} parent=1 // pred_check
      _
    $region19: #{lang_model_forward.1} parent=1 // pred_check_branch
      %51 = sbr.rel (0) target = $region21
    $region20: #{lang_model_forward.1} parent=1 // pred_region
      _
    $region21: #{lang_model_forward.1} parent=1 // pred_fallthru
      _
    // Predicated region
    $region22: #{lang_model_forward.1} parent=1 // pred_check
      _
    $region23: #{lang_model_forward.1} parent=1 // pred_check_branch
      %53 = sbr.rel (0) target = $region25
    $region24: #{lang_model_forward.1} parent=1 // pred_region
      %54 = dma.done [#allocation4], 8192
    $region25: #{lang_model_forward.1} parent=1 // pred_fallthru
      _
    // Predicated region
    $region26: #{lang_model_forward.1} parent=1 // pred_check
      _
    $region27: #{lang_model_forward.1} parent=1 // pred_check_branch
      %56 = sbr.rel (0) target = $region29
    $region28: #{lang_model_forward.1} parent=1 // pred_region
      %57 = dma.done [#allocation6], 8192
    $region29: #{lang_model_forward.1} parent=1 // pred_fallthru
      _
    // Predicated region
    $region30: #{lang_model_forward.1} parent=1 // pred_check
      _
    $region31: #{lang_model_forward.1} parent=1 // pred_check_branch
      %59 = sbr.rel (0) target = $region33
    $region32: #{lang_model_forward.1} parent=1 // pred_region
      %60 = dma.done [#allocation6], 2048
    $region33: #{lang_model_forward.1} parent=1 // pred_fallthru
      _
    %v61 = vld [vmem:[%s0] sm:$0xff]
    %v62 = vld [vmem:[%s0 + $0x8] sm:$0xff]
    %v63 = vld [vmem:[%s0 + $0x10] sm:$0xff]
    %v64 = vld [vmem:[%s0 + $0x18] sm:$0xff]
    %v65 = vld [vmem:[%s0 + $0x20] sm:$0xff]
    %v66 = vld [vmem:[%s0 + $0x28] sm:$0xff]
    %v67 = vld [vmem:[%s0 + $0x30] sm:$0xff]
    %v68 = vld [vmem:[%s0 + $0x38] sm:$0xff]
    %v69 = vlaneseq
    %v70 = vand.u32 %v69, 127
    %71 = vset.pattern.permute.xlu0 0
    %72 = vperm.xlu0 %71, %v61
    %v73 = vpop.permute.xlu0 %72
    %74 = vset.pattern.permute.xlu0 0
    %75 = vperm.xlu0 %74, %v62
    %v76 = vpop.permute.xlu0 %75
    %77 = vset.pattern.permute.xlu0 0
    %78 = vperm.xlu0 %77, %v63
    %v79 = vpop.permute.xlu0 %78
    %80 = vset.pattern.permute.xlu0 0
    %81 = vperm.xlu0 %80, %v64
    %v82 = vpop.permute.xlu0 %81
    %83 = vset.pattern.permute.xlu0 0
    %84 = vperm.xlu0 %83, %v65
    %v85 = vpop.permute.xlu0 %84
    %86 = vset.pattern.permute.xlu0 0
    %87 = vperm.xlu0 %86, %v66
    %v88 = vpop.permute.xlu0 %87
    %89 = vset.pattern.permute.xlu0 0
    %90 = vperm.xlu0 %89, %v67
    %v91 = vpop.permute.xlu0 %90
    %92 = vset.pattern.permute.xlu0 0
    %93 = vperm.xlu0 %92, %v68
    %v94 = vpop.permute.xlu0 %93
    %vm95 = vcmp.eq.s32.totalorder %v70, %v73
    %vm96 = vcmp.eq.s32.totalorder %v70, %v76
    %vm97 = vcmp.eq.s32.totalorder %v70, %v79
    %vm98 = vcmp.eq.s32.totalorder %v70, %v82
    %vm99 = vcmp.eq.s32.totalorder %v70, %v85
    %vm100 = vcmp.eq.s32.totalorder %v70, %v88
    %vm101 = vcmp.eq.s32.totalorder %v70, %v91
    %vm102 = vcmp.eq.s32.totalorder %v70, %v94
    %v103 = vsel %vm95, 1, 0
    %v104 = vsel %vm96, 1, 0
    %v105 = vsel %vm97, 1, 0
    %v106 = vsel %vm98, 1, 0
    %v107 = vsel %vm99, 1, 0
    %v108 = vsel %vm100, 1, 0
    %v109 = vsel %vm101, 1, 0
    %v110 = vsel %vm102, 1, 0
    %v111 = vcvt.s32.f32 %v103
    %v112 = vcvt.s32.f32 %v104
    %v113 = vcvt.s32.f32 %v105
    %v114 = vcvt.s32.f32 %v106
    %v115 = vcvt.s32.f32 %v107
    %v116 = vcvt.s32.f32 %v108
    %v117 = vcvt.s32.f32 %v109
    %v118 = vcvt.s32.f32 %v110
    %v119 = vld [vmem:[#allocation3] sm:$0xff]
    %v120 = vld [vmem:[#allocation3 + $0x8] sm:$0xff]
    %v121 = vld [vmem:[#allocation3 + $0x10] sm:$0xff]
    %v122 = vld [vmem:[#allocation3 + $0x18] sm:$0xff]
    %v123 = vld [vmem:[#allocation3 + $0x20] sm:$0xff]
    %v124 = vld [vmem:[#allocation3 + $0x28] sm:$0xff]
    %v125 = vld [vmem:[#allocation3 + $0x30] sm:$0xff]
    %v126 = vld [vmem:[#allocation3 + $0x38] sm:$0xff]
    %v127 = vld [vmem:[#allocation3 + $0x40] sm:$0xff]
    %v128 = vld [vmem:[#allocation3 + $0x48] sm:$0xff]
    %v129 = vld [vmem:[#allocation3 + $0x50] sm:$0xff]
    %v130 = vld [vmem:[#allocation3 + $0x58] sm:$0xff]
    %v131 = vld [vmem:[#allocation3 + $0x60] sm:$0xff]
    %v132 = vld [vmem:[#allocation3 + $0x68] sm:$0xff]
    %v133 = vld [vmem:[#allocation3 + $0x70] sm:$0xff]
    %v134 = vld [vmem:[#allocation3 + $0x78] sm:$0xff]
    %v135 = vld [vmem:[#allocation3 + $0x80] sm:$0xff]
    %v136 = vld [vmem:[#allocation3 + $0x88] sm:$0xff]
    %v137 = vld [vmem:[#allocation3 + $0x90] sm:$0xff]
    %v138 = vld [vmem:[#allocation3 + $0x98] sm:$0xff]
    %v139 = vld [vmem:[#allocation3 + $0xa0] sm:$0xff]
    %v140 = vld [vmem:[#allocation3 + $0xa8] sm:$0xff]
    %v141 = vld [vmem:[#allocation3 + $0xb0] sm:$0xff]
    %v142 = vld [vmem:[#allocation3 + $0xb8] sm:$0xff]
    %v143 = vld [vmem:[#allocation3 + $0xc0] sm:$0xff]
    %v144 = vld [vmem:[#allocation3 + $0xc8] sm:$0xff]
    %v145 = vld [vmem:[#allocation3 + $0xd0] sm:$0xff]
    %v146 = vld [vmem:[#allocation3 + $0xd8] sm:$0xff]
    %v147 = vld [vmem:[#allocation3 + $0xe0] sm:$0xff]
    %v148 = vld [vmem:[#allocation3 + $0xe8] sm:$0xff]
    %v149 = vld [vmem:[#allocation3 + $0xf0] sm:$0xff]
    %v150 = vld [vmem:[#allocation3 + $0xf8] sm:$0xff]
    %v151 = vld [vmem:[#allocation3 + $0x100] sm:$0xff]
    %v152 = vld [vmem:[#allocation3 + $0x108] sm:$0xff]
    %v153 = vld [vmem:[#allocation3 + $0x110] sm:$0xff]
    %v154 = vld [vmem:[#allocation3 + $0x118] sm:$0xff]
    %v155 = vld [vmem:[#allocation3 + $0x120] sm:$0xff]
    %v156 = vld [vmem:[#allocation3 + $0x128] sm:$0xff]
    %v157 = vld [vmem:[#allocation3 + $0x130] sm:$0xff]
    %v158 = vld [vmem:[#allocation3 + $0x138] sm:$0xff]
    %v159 = vld [vmem:[#allocation3 + $0x140] sm:$0xff]
    %v160 = vld [vmem:[#allocation3 + $0x148] sm:$0xff]
    %v161 = vld [vmem:[#allocation3 + $0x150] sm:$0xff]
    %v162 = vld [vmem:[#allocation3 + $0x158] sm:$0xff]
    %v163 = vld [vmem:[#allocation3 + $0x160] sm:$0xff]
    %v164 = vld [vmem:[#allocation3 + $0x168] sm:$0xff]
    %v165 = vld [vmem:[#allocation3 + $0x170] sm:$0xff]
    %v166 = vld [vmem:[#allocation3 + $0x178] sm:$0xff]
    %v167 = vld [vmem:[#allocation3 + $0x180] sm:$0xff]
    %v168 = vld [vmem:[#allocation3 + $0x188] sm:$0xff]
    %v169 = vld [vmem:[#allocation3 + $0x190] sm:$0xff]
    %v170 = vld [vmem:[#allocation3 + $0x198] sm:$0xff]
    %v171 = vld [vmem:[#allocation3 + $0x1a0] sm:$0xff]
    %v172 = vld [vmem:[#allocation3 + $0x1a8] sm:$0xff]
    %v173 = vld [vmem:[#allocation3 + $0x1b0] sm:$0xff]
    %v174 = vld [vmem:[#allocation3 + $0x1b8] sm:$0xff]
    %v175 = vld [vmem:[#allocation3 + $0x1c0] sm:$0xff]
    %v176 = vld [vmem:[#allocation3 + $0x1c8] sm:$0xff]
    %v177 = vld [vmem:[#allocation3 + $0x1d0] sm:$0xff]
    %v178 = vld [vmem:[#allocation3 + $0x1d8] sm:$0xff]
    %v179 = vld [vmem:[#allocation3 + $0x1e0] sm:$0xff]
    %v180 = vld [vmem:[#allocation3 + $0x1e8] sm:$0xff]
    %v181 = vld [vmem:[#allocation3 + $0x1f0] sm:$0xff]
    %v182 = vld [vmem:[#allocation3 + $0x1f8] sm:$0xff]
    %183 = vmatprep.subr.mxu0 %v120
    %184 = vmatpush1.msra.mxu0 %v119
    %185 = vmatprep.subr.mxu0 %v124
    %186 = vmatpush1.msra.mxu0 %v123
    %187 = vmatprep.subr.mxu0 %v128
    %188 = vmatpush1.msra.mxu0 %v127
    %189 = vmatprep.subr.mxu0 %v132
    %190 = vmatpush1.msra.mxu0 %v131
    %191 = vmatprep.subr.mxu0 %v136
    %192 = vmatpush1.msra.mxu0 %v135
    %193 = vmatprep.subr.mxu0 %v140
    %194 = vmatpush1.msra.mxu0 %v139
    %195 = vmatprep.subr.mxu0 %v144
    %196 = vmatpush1.msra.mxu0 %v143
    %197 = vmatprep.subr.mxu0 %v148
    %198 = vmatpush1.msra.mxu0 %v147
    %199 = vmatprep.subr.mxu0 %v152
    %200 = vmatpush1.msra.mxu0 %v151
    %201 = vmatprep.subr.mxu0 %v156
    %202 = vmatpush1.msra.mxu0 %v155
    %203 = vmatprep.subr.mxu0 %v160
    %204 = vmatpush1.msra.mxu0 %v159
    %205 = vmatprep.subr.mxu0 %v164
    %206 = vmatpush1.msra.mxu0 %v163
    %207 = vmatprep.subr.mxu0 %v168
    %208 = vmatpush1.msra.mxu0 %v167
    %209 = vmatprep.subr.mxu0 %v172
    %210 = vmatpush1.msra.mxu0 %v171
    %211 = vmatprep.subr.mxu0 %v176
    %212 = vmatpush1.msra.mxu0 %v175
    %213 = vmatprep.subr.mxu0 %v180
    %214 = vmatpush1.msra.mxu0 %v179
    %215 = vmatprep.subr.mxu0 0.0
    %216 = vmatpush1.msra.mxu0 0.0
    %217 = vmatprep.subr.mxu0 0.0
    %218 = vmatpush1.msra.mxu0 0.0
    %219 = vmatprep.subr.mxu0 0.0
    %220 = vmatpush1.msra.mxu0 0.0
    %221 = vmatprep.subr.mxu0 0.0
    %222 = vmatpush1.msra.mxu0 0.0
    %223 = vmatprep.subr.mxu0 0.0
    %224 = vmatpush1.msra.mxu0 0.0
    %225 = vmatprep.subr.mxu0 0.0
    %226 = vmatpush1.msra.mxu0 0.0
    %227 = vmatprep.subr.mxu0 0.0
    %228 = vmatpush1.msra.mxu0 0.0
    %229 = vmatprep.subr.mxu0 0.0
    %230 = vmatpush1.msra.mxu0 0.0
    %231 = vmatprep.subr.mxu0 0.0
    %232 = vmatpush1.msra.mxu0 0.0
    %233 = vmatprep.subr.mxu0 0.0
    %234 = vmatpush1.msra.mxu0 0.0
    %235 = vmatprep.subr.mxu0 0.0
    %236 = vmatpush1.msra.mxu0 0.0
    %237 = vmatprep.subr.mxu0 0.0
    %238 = vmatpush1.msra.mxu0 0.0
    %239 = vmatprep.subr.mxu0 0.0
    %240 = vmatpush1.msra.mxu0 0.0
    %241 = vmatprep.subr.mxu0 0.0
    %242 = vmatpush1.msra.mxu0 0.0
    %243 = vmatprep.subr.mxu0 0.0
    %244 = vmatpush1.msra.mxu0 0.0
    %245 = vmatprep.subr.mxu0 0.0
    %246 = vmatpush1.msra.mxu0 0.0
    %247 = vmatprep.mubr.f32.mxu0 0.0
    %248 = vmatmul.mubr.f32.gmra.mrb[0].mxu0 %v111
    %v249 = vpop.f32.mrb[0].mxu0
    %v250 = vadd.f32 0.0, %v249
    %v251 = vpop.f32.mrb[0].mxu0
    %v252 = vadd.f32 0.0, %v251
    %253 = vmatprep.mubr.f32.mxu0 0.0
    %254 = vmatmul.mubr.f32.gmra.mrb[0].mxu0 %v112
    %v255 = vpop.f32.mrb[0].mxu0
    %v256 = vadd.f32 0.0, %v255
    %v257 = vpop.f32.mrb[0].mxu0
    %v258 = vadd.f32 0.0, %v257
    %259 = vmatprep.mubr.f32.mxu0 0.0
    %260 = vmatmul.mubr.f32.gmra.mrb[0].mxu0 %v113
    %v261 = vpop.f32.mrb[0].mxu0
    %v262 = vadd.f32 0.0, %v261
    %v263 = vpop.f32.mrb[0].mxu0
    %v264 = vadd.f32 0.0, %v263
    %265 = vmatprep.mubr.f32.mxu0 0.0
    %266 = vmatmul.mubr.f32.gmra.mrb[0].mxu0 %v114
    %v267 = vpop.f32.mrb[0].mxu0
    %v268 = vadd.f32 0.0, %v267
    %v269 = vpop.f32.mrb[0].mxu0
    %v270 = vadd.f32 0.0, %v269
    %271 = vmatprep.mubr.f32.mxu0 0.0
    %272 = vmatmul.mubr.f32.gmra.mrb[0].mxu0 %v115
    %v273 = vpop.f32.mrb[0].mxu0
    %v274 = vadd.f32 0.0, %v273
    %v275 = vpop.f32.mrb[0].mxu0
    %v276 = vadd.f32 0.0, %v275
    %277 = vmatprep.mubr.f32.mxu0 0.0
    %278 = vmatmul.mubr.f32.gmra.mrb[0].mxu0 %v116
    %v279 = vpop.f32.mrb[0].mxu0
    %v280 = vadd.f32 0.0, %v279
    %v281 = vpop.f32.mrb[0].mxu0
    %v282 = vadd.f32 0.0, %v281
    %283 = vmatprep.mubr.f32.mxu0 0.0
    %284 = vmatmul.mubr.f32.gmra.mrb[0].mxu0 %v117
    %v285 = vpop.f32.mrb[0].mxu0
    %v286 = vadd.f32 0.0, %v285
    %v287 = vpop.f32.mrb[0].mxu0
    %v288 = vadd.f32 0.0, %v287
    %289 = vmatprep.mubr.f32.mxu0 0.0
    %290 = vmatmul.mubr.f32.gmra.mrb[0].mxu0 %v118
    %v291 = vpop.f32.mrb[0].mxu0
    %v292 = vadd.f32 0.0, %v291
    %v293 = vpop.f32.mrb[0].mxu0
    %v294 = vadd.f32 0.0, %v293
    %295 = vdwg.mxu0
    %296 = vmatprep.subr.mxu0 %v122
    %297 = vmatpush1.msra.mxu0 %v121
    %298 = vmatprep.subr.mxu0 %v126
    %299 = vmatpush1.msra.mxu0 %v125
    %300 = vmatprep.subr.mxu0 %v130
    %301 = vmatpush1.msra.mxu0 %v129
    %302 = vmatprep.subr.mxu0 %v134
    %303 = vmatpush1.msra.mxu0 %v133
    %304 = vmatprep.subr.mxu0 %v138
    %305 = vmatpush1.msra.mxu0 %v137
    %306 = vmatprep.subr.mxu0 %v142
    %307 = vmatpush1.msra.mxu0 %v141
    %308 = vmatprep.subr.mxu0 %v146
    %309 = vmatpush1.msra.mxu0 %v145
    %310 = vmatprep.subr.mxu0 %v150
    %311 = vmatpush1.msra.mxu0 %v149
    %312 = vmatprep.subr.mxu0 %v154
    %313 = vmatpush1.msra.mxu0 %v153
    %314 = vmatprep.subr.mxu0 %v158
    %315 = vmatpush1.msra.mxu0 %v157
    %316 = vmatprep.subr.mxu0 %v162
    %317 = vmatpush1.msra.mxu0 %v161
    %318 = vmatprep.subr.mxu0 %v166
    %319 = vmatpush1.msra.mxu0 %v165
    %320 = vmatprep.subr.mxu0 %v170
    %321 = vmatpush1.msra.mxu0 %v169
    %322 = vmatprep.subr.mxu0 %v174
    %323 = vmatpush1.msra.mxu0 %v173
    %324 = vmatprep.subr.mxu0 %v178
    %325 = vmatpush1.msra.mxu0 %v177
    %326 = vmatprep.subr.mxu0 %v182
    %327 = vmatpush1.msra.mxu0 %v181
    %328 = vmatprep.subr.mxu0 0.0
    %329 = vmatpush1.msra.mxu0 0.0
    %330 = vmatprep.subr.mxu0 0.0
    %331 = vmatpush1.msra.mxu0 0.0
    %332 = vmatprep.subr.mxu0 0.0
    %333 = vmatpush1.msra.mxu0 0.0
    %334 = vmatprep.subr.mxu0 0.0
    %335 = vmatpush1.msra.mxu0 0.0
    %336 = vmatprep.subr.mxu0 0.0
    %337 = vmatpush1.msra.mxu0 0.0
    %338 = vmatprep.subr.mxu0 0.0
    %339 = vmatpush1.msra.mxu0 0.0
    %340 = vmatprep.subr.mxu0 0.0
    %341 = vmatpush1.msra.mxu0 0.0
    %342 = vmatprep.subr.mxu0 0.0
    %343 = vmatpush1.msra.mxu0 0.0
    %344 = vmatprep.subr.mxu0 0.0
    %345 = vmatpush1.msra.mxu0 0.0
    %346 = vmatprep.subr.mxu0 0.0
    %347 = vmatpush1.msra.mxu0 0.0
    %348 = vmatprep.subr.mxu0 0.0
    %349 = vmatpush1.msra.mxu0 0.0
    %350 = vmatprep.subr.mxu0 0.0
    %351 = vmatpush1.msra.mxu0 0.0
    %352 = vmatprep.subr.mxu0 0.0
    %353 = vmatpush1.msra.mxu0 0.0
    %354 = vmatprep.subr.mxu0 0.0
    %355 = vmatpush1.msra.mxu0 0.0
    %356 = vmatprep.subr.mxu0 0.0
    %357 = vmatpush1.msra.mxu0 0.0
    %358 = vmatprep.subr.mxu0 0.0
    %359 = vmatpush1.msra.mxu0 0.0
    %360 = vmatprep.mubr.f32.mxu0 0.0
    %361 = vmatmul.mubr.f32.gmra.mrb[0].mxu0 %v111
    %v362 = vpop.f32.mrb[0].mxu0
    %v363 = vadd.f32 0.0, %v362
    %v364 = vpop.f32.mrb[0].mxu0
    %v365 = vadd.f32 0.0, %v364
    %366 = vmatprep.mubr.f32.mxu0 0.0
    %367 = vmatmul.mubr.f32.gmra.mrb[0].mxu0 %v112
    %v368 = vpop.f32.mrb[0].mxu0
    %v369 = vadd.f32 0.0, %v368
    %v370 = vpop.f32.mrb[0].mxu0
    %v371 = vadd.f32 0.0, %v370
    %372 = vmatprep.mubr.f32.mxu0 0.0
    %373 = vmatmul.mubr.f32.gmra.mrb[0].mxu0 %v113
    %v374 = vpop.f32.mrb[0].mxu0
    %v375 = vadd.f32 0.0, %v374
    %v376 = vpop.f32.mrb[0].mxu0
    %v377 = vadd.f32 0.0, %v376
    %378 = vmatprep.mubr.f32.mxu0 0.0
    %379 = vmatmul.mubr.f32.gmra.mrb[0].mxu0 %v114
    %v380 = vpop.f32.mrb[0].mxu0
    %v381 = vadd.f32 0.0, %v380
    %v382 = vpop.f32.mrb[0].mxu0
    %v383 = vadd.f32 0.0, %v382
    %384 = vmatprep.mubr.f32.mxu0 0.0
    %385 = vmatmul.mubr.f32.gmra.mrb[0].mxu0 %v115
    %v386 = vpop.f32.mrb[0].mxu0
    %v387 = vadd.f32 0.0, %v386
    %v388 = vpop.f32.mrb[0].mxu0
    %v389 = vadd.f32 0.0, %v388
    %390 = vmatprep.mubr.f32.mxu0 0.0
    %391 = vmatmul.mubr.f32.gmra.mrb[0].mxu0 %v116
    %v392 = vpop.f32.mrb[0].mxu0
    %v393 = vadd.f32 0.0, %v392
    %v394 = vpop.f32.mrb[0].mxu0
    %v395 = vadd.f32 0.0, %v394
    %396 = vmatprep.mubr.f32.mxu0 0.0
    %397 = vmatmul.mubr.f32.gmra.mrb[0].mxu0 %v117
    %v398 = vpop.f32.mrb[0].mxu0
    %v399 = vadd.f32 0.0, %v398
    %v400 = vpop.f32.mrb[0].mxu0
    %v401 = vadd.f32 0.0, %v400
    %402 = vmatprep.mubr.f32.mxu0 0.0
    %403 = vmatmul.mubr.f32.gmra.mrb[0].mxu0 %v118
    %v404 = vpop.f32.mrb[0].mxu0
    %v405 = vadd.f32 0.0, %v404
    %v406 = vpop.f32.mrb[0].mxu0
    %v407 = vadd.f32 0.0, %v406
    %408 = vdwg.mxu0
    %409 = vst [vmem:[#allocation2] sm:$0xff] %v250
    %410 = vst [vmem:[#allocation2 + $0x8] sm:$0xff] %v252
    %411 = vst [vmem:[#allocation2 + $0x10] sm:$0xff] %v363
    %412 = vst [vmem:[#allocation2 + $0x18] sm:$0xff] %v365
    %413 = vst [vmem:[#allocation2 + $0x20] sm:$0xff] %v256
    %414 = vst [vmem:[#allocation2 + $0x28] sm:$0xff] %v258
    %415 = vst [vmem:[#allocation2 + $0x30] sm:$0xff] %v369
    %416 = vst [vmem:[#allocation2 + $0x38] sm:$0xff] %v371
    %417 = vst [vmem:[#allocation2 + $0x40] sm:$0xff] %v262
    %418 = vst [vmem:[#allocation2 + $0x48] sm:$0xff] %v264
    %419 = vst [vmem:[#allocation2 + $0x50] sm:$0xff] %v375
    %420 = vst [vmem:[#allocation2 + $0x58] sm:$0xff] %v377
    %421 = vst [vmem:[#allocation2 + $0x60] sm:$0xff] %v268
    %422 = vst [vmem:[#allocation2 + $0x68] sm:$0xff] %v270
    %423 = vst [vmem:[#allocation2 + $0x70] sm:$0xff] %v381
    %424 = vst [vmem:[#allocation2 + $0x78] sm:$0xff] %v383
    %425 = vst [vmem:[#allocation2 + $0x80] sm:$0xff] %v274
    %426 = vst [vmem:[#allocation2 + $0x88] sm:$0xff] %v276
    %427 = vst [vmem:[#allocation2 + $0x90] sm:$0xff] %v387
    %428 = vst [vmem:[#allocation2 + $0x98] sm:$0xff] %v389
    %429 = vst [vmem:[#allocation2 + $0xa0] sm:$0xff] %v280
    %430 = vst [vmem:[#allocation2 + $0xa8] sm:$0xff] %v282
    %431 = vst [vmem:[#allocation2 + $0xb0] sm:$0xff] %v393
    %432 = vst [vmem:[#allocation2 + $0xb8] sm:$0xff] %v395
    %433 = vst [vmem:[#allocation2 + $0xc0] sm:$0xff] %v286
    %434 = vst [vmem:[#allocation2 + $0xc8] sm:$0xff] %v288
    %435 = vst [vmem:[#allocation2 + $0xd0] sm:$0xff] %v399
    %436 = vst [vmem:[#allocation2 + $0xd8] sm:$0xff] %v401
    %437 = vst [vmem:[#allocation2 + $0xe0] sm:$0xff] %v292
    %438 = vst [vmem:[#allocation2 + $0xe8] sm:$0xff] %v294
    %439 = vst [vmem:[#allocation2 + $0xf0] sm:$0xff] %v405
    %440 = vst [vmem:[#allocation2 + $0xf8] sm:$0xff] %v407
    %v441 = vld [vmem:[#allocation2] sm:$0xff]
    %v442 = vld [vmem:[#allocation2 + $0x8] sm:$0xff]
    %v443 = vld [vmem:[#allocation2 + $0x10] sm:$0xff]
    %v444 = vld [vmem:[#allocation2 + $0x18] sm:$0xff]
    %v445 = vld [vmem:[#allocation5] sm:$0xff]
    %v446 = vld [vmem:[#allocation5 + $0x8] sm:$0xff]
    %v447 = vld [vmem:[#allocation5 + $0x10] sm:$0xff]
    %v448 = vld [vmem:[#allocation5 + $0x18] sm:$0xff]
    %v449 = vld [vmem:[#allocation5 + $0x20] sm:$0xff]
    %v450 = vld [vmem:[#allocation5 + $0x28] sm:$0xff]
    %v451 = vld [vmem:[#allocation5 + $0x30] sm:$0xff]
    %v452 = vld [vmem:[#allocation5 + $0x38] sm:$0xff]
    %v453 = vld [vmem:[#allocation5 + $0x40] sm:$0xff]
    %v454 = vld [vmem:[#allocation5 + $0x48] sm:$0xff]
    %v455 = vld [vmem:[#allocation5 + $0x50] sm:$0xff]
    %v456 = vld [vmem:[#allocation5 + $0x58] sm:$0xff]
    %v457 = vld [vmem:[#allocation5 + $0x60] sm:$0xff]
    %v458 = vld [vmem:[#allocation5 + $0x68] sm:$0xff]
    %v459 = vld [vmem:[#allocation5 + $0x70] sm:$0xff]
    %v460 = vld [vmem:[#allocation5 + $0x78] sm:$0xff]
    %v461 = vld [vmem:[#allocation5 + $0x80] sm:$0xff]
    %v462 = vld [vmem:[#allocation5 + $0x88] sm:$0xff]
    %v463 = vld [vmem:[#allocation5 + $0x90] sm:$0xff]
    %v464 = vld [vmem:[#allocation5 + $0x98] sm:$0xff]
    %v465 = vld [vmem:[#allocation5 + $0xa0] sm:$0xff]
    %v466 = vld [vmem:[#allocation5 + $0xa8] sm:$0xff]
    %v467 = vld [vmem:[#allocation5 + $0xb0] sm:$0xff]
    %v468 = vld [vmem:[#allocation5 + $0xb8] sm:$0xff]
    %v469 = vld [vmem:[#allocation5 + $0xc0] sm:$0xff]
    %v470 = vld [vmem:[#allocation5 + $0xc8] sm:$0xff]
    %v471 = vld [vmem:[#allocation5 + $0xd0] sm:$0xff]
    %v472 = vld [vmem:[#allocation5 + $0xd8] sm:$0xff]
    %v473 = vld [vmem:[#allocation5 + $0xe0] sm:$0xff]
    %v474 = vld [vmem:[#allocation5 + $0xe8] sm:$0xff]
    %v475 = vld [vmem:[#allocation5 + $0xf0] sm:$0xff]
    %v476 = vld [vmem:[#allocation5 + $0xf8] sm:$0xff]
    %v477 = vld [vmem:[#allocation5 + $0x100] sm:$0xff]
    %v478 = vld [vmem:[#allocation5 + $0x108] sm:$0xff]
    %v479 = vld [vmem:[#allocation5 + $0x110] sm:$0xff]
    %v480 = vld [vmem:[#allocation5 + $0x118] sm:$0xff]
    %v481 = vld [vmem:[#allocation5 + $0x120] sm:$0xff]
    %v482 = vld [vmem:[#allocation5 + $0x128] sm:$0xff]
    %v483 = vld [vmem:[#allocation5 + $0x130] sm:$0xff]
    %v484 = vld [vmem:[#allocation5 + $0x138] sm:$0xff]
    %v485 = vld [vmem:[#allocation5 + $0x140] sm:$0xff]
    %v486 = vld [vmem:[#allocation5 + $0x148] sm:$0xff]
    %v487 = vld [vmem:[#allocation5 + $0x150] sm:$0xff]
    %v488 = vld [vmem:[#allocation5 + $0x158] sm:$0xff]
    %v489 = vld [vmem:[#allocation5 + $0x160] sm:$0xff]
    %v490 = vld [vmem:[#allocation5 + $0x168] sm:$0xff]
    %v491 = vld [vmem:[#allocation5 + $0x170] sm:$0xff]
    %v492 = vld [vmem:[#allocation5 + $0x178] sm:$0xff]
    %v493 = vld [vmem:[#allocation5 + $0x180] sm:$0xff]
    %v494 = vld [vmem:[#allocation5 + $0x188] sm:$0xff]
    %v495 = vld [vmem:[#allocation5 + $0x190] sm:$0xff]
    %v496 = vld [vmem:[#allocation5 + $0x198] sm:$0xff]
    %v497 = vld [vmem:[#allocation5 + $0x1a0] sm:$0xff]
    %v498 = vld [vmem:[#allocation5 + $0x1a8] sm:$0xff]
    %v499 = vld [vmem:[#allocation5 + $0x1b0] sm:$0xff]
    %v500 = vld [vmem:[#allocation5 + $0x1b8] sm:$0xff]
    %v501 = vld [vmem:[#allocation5 + $0x1c0] sm:$0xff]
    %v502 = vld [vmem:[#allocation5 + $0x1c8] sm:$0xff]
    %v503 = vld [vmem:[#allocation5 + $0x1d0] sm:$0xff]
    %v504 = vld [vmem:[#allocation5 + $0x1d8] sm:$0xff]
    %v505 = vld [vmem:[#allocation5 + $0x1e0] sm:$0xff]
    %v506 = vld [vmem:[#allocation5 + $0x1e8] sm:$0xff]
    %v507 = vld [vmem:[#allocation5 + $0x1f0] sm:$0xff]
    %v508 = vld [vmem:[#allocation5 + $0x1f8] sm:$0xff]
    %509 = vmatprep.subr.mxu0 %v446
    %510 = vmatpush1.msra.mxu0 %v445
    %511 = vmatprep.subr.mxu0 %v450
    %512 = vmatpush1.msra.mxu0 %v449
    %513 = vmatprep.subr.mxu0 %v454
    %514 = vmatpush1.msra.mxu0 %v453
    %515 = vmatprep.subr.mxu0 %v458
    %516 = vmatpush1.msra.mxu0 %v457
    %517 = vmatprep.subr.mxu0 %v462
    %518 = vmatpush1.msra.mxu0 %v461
    %519 = vmatprep.subr.mxu0 %v466
    %520 = vmatpush1.msra.mxu0 %v465
    %521 = vmatprep.subr.mxu0 %v470
    %522 = vmatpush1.msra.mxu0 %v469
    %523 = vmatprep.subr.mxu0 %v474
    %524 = vmatpush1.msra.mxu0 %v473
    %525 = vmatprep.subr.mxu0 %v478
    %526 = vmatpush1.msra.mxu0 %v477
    %527 = vmatprep.subr.mxu0 %v482
    %528 = vmatpush1.msra.mxu0 %v481
    %529 = vmatprep.subr.mxu0 %v486
    %530 = vmatpush1.msra.mxu0 %v485
    %531 = vmatprep.subr.mxu0 %v490
    %532 = vmatpush1.msra.mxu0 %v489
    %533 = vmatprep.subr.mxu0 %v494
    %534 = vmatpush1.msra.mxu0 %v493
    %535 = vmatprep.subr.mxu0 %v498
    %536 = vmatpush1.msra.mxu0 %v497
    %537 = vmatprep.subr.mxu0 %v502
    %538 = vmatpush1.msra.mxu0 %v501
    %539 = vmatprep.subr.mxu0 %v506
    %540 = vmatpush1.msra.mxu0 %v505
    %541 = vmatprep.subr.mxu0 0.0
    %542 = vmatpush1.msra.mxu0 0.0
    %543 = vmatprep.subr.mxu0 0.0
    %544 = vmatpush1.msra.mxu0 0.0
    %545 = vmatprep.subr.mxu0 0.0
    %546 = vmatpush1.msra.mxu0 0.0
    %547 = vmatprep.subr.mxu0 0.0
    %548 = vmatpush1.msra.mxu0 0.0
    %549 = vmatprep.subr.mxu0 0.0
    %550 = vmatpush1.msra.mxu0 0.0
    %551 = vmatprep.subr.mxu0 0.0
    %552 = vmatpush1.msra.mxu0 0.0
    %553 = vmatprep.subr.mxu0 0.0
    %554 = vmatpush1.msra.mxu0 0.0
    %555 = vmatprep.subr.mxu0 0.0
    %556 = vmatpush1.msra.mxu0 0.0
    %557 = vmatprep.subr.mxu0 0.0
    %558 = vmatpush1.msra.mxu0 0.0
    %559 = vmatprep.subr.mxu0 0.0
    %560 = vmatpush1.msra.mxu0 0.0
    %561 = vmatprep.subr.mxu0 0.0
    %562 = vmatpush1.msra.mxu0 0.0
    %563 = vmatprep.subr.mxu0 0.0
    %564 = vmatpush1.msra.mxu0 0.0
    %565 = vmatprep.subr.mxu0 0.0
    %566 = vmatpush1.msra.mxu0 0.0
    %567 = vmatprep.subr.mxu0 0.0
    %568 = vmatpush1.msra.mxu0 0.0
    %569 = vmatprep.subr.mxu0 0.0
    %570 = vmatpush1.msra.mxu0 0.0
    %571 = vmatprep.subr.mxu0 0.0
    %572 = vmatpush1.msra.mxu0 0.0
    %573 = vmatprep.mubr.f32.mxu0 0.0
    %574 = vmatmul.mubr.f32.gmra.mrb[0].mxu0 0.0
    %v575 = vpop.f32.mrb[0].mxu0
    %v576 = vadd.f32 0.0, %v575
    %v577 = vpop.f32.mrb[0].mxu0
    %v578 = vadd.f32 0.0, %v577
    %579 = vdwg.mxu0
    %580 = vmatprep.subr.mxu0 %v448
    %581 = vmatpush1.msra.mxu0 %v447
    %582 = vmatprep.subr.mxu0 %v452
    %583 = vmatpush1.msra.mxu0 %v451
    %584 = vmatprep.subr.mxu0 %v456
    %585 = vmatpush1.msra.mxu0 %v455
    %586 = vmatprep.subr.mxu0 %v460
    %587 = vmatpush1.msra.mxu0 %v459
    %588 = vmatprep.subr.mxu0 %v464
    %589 = vmatpush1.msra.mxu0 %v463
    %590 = vmatprep.subr.mxu0 %v468
    %591 = vmatpush1.msra.mxu0 %v467
    %592 = vmatprep.subr.mxu0 %v472
    %593 = vmatpush1.msra.mxu0 %v471
    %594 = vmatprep.subr.mxu0 %v476
    %595 = vmatpush1.msra.mxu0 %v475
    %596 = vmatprep.subr.mxu0 %v480
    %597 = vmatpush1.msra.mxu0 %v479
    %598 = vmatprep.subr.mxu0 %v484
    %599 = vmatpush1.msra.mxu0 %v483
    %600 = vmatprep.subr.mxu0 %v488
    %601 = vmatpush1.msra.mxu0 %v487
    %602 = vmatprep.subr.mxu0 %v492
    %603 = vmatpush1.msra.mxu0 %v491
    %604 = vmatprep.subr.mxu0 %v496
    %605 = vmatpush1.msra.mxu0 %v495
    %606 = vmatprep.subr.mxu0 %v500
    %607 = vmatpush1.msra.mxu0 %v499
    %608 = vmatprep.subr.mxu0 %v504
    %609 = vmatpush1.msra.mxu0 %v503
    %610 = vmatprep.subr.mxu0 %v508
    %611 = vmatpush1.msra.mxu0 %v507
    %612 = vmatprep.subr.mxu0 0.0
    %613 = vmatpush1.msra.mxu0 0.0
    %614 = vmatprep.subr.mxu0 0.0
    %615 = vmatpush1.msra.mxu0 0.0
    %616 = vmatprep.subr.mxu0 0.0
    %617 = vmatpush1.msra.mxu0 0.0
    %618 = vmatprep.subr.mxu0 0.0
    %619 = vmatpush1.msra.mxu0 0.0
    %620 = vmatprep.subr.mxu0 0.0
    %621 = vmatpush1.msra.mxu0 0.0
    %622 = vmatprep.subr.mxu0 0.0
    %623 = vmatpush1.msra.mxu0 0.0
    %624 = vmatprep.subr.mxu0 0.0
    %625 = vmatpush1.msra.mxu0 0.0
    %626 = vmatprep.subr.mxu0 0.0
    %627 = vmatpush1.msra.mxu0 0.0
    %628 = vmatprep.subr.mxu0 0.0
    %629 = vmatpush1.msra.mxu0 0.0
    %630 = vmatprep.subr.mxu0 0.0
    %631 = vmatpush1.msra.mxu0 0.0
    %632 = vmatprep.subr.mxu0 0.0
    %633 = vmatpush1.msra.mxu0 0.0
    %634 = vmatprep.subr.mxu0 0.0
    %635 = vmatpush1.msra.mxu0 0.0
    %636 = vmatprep.subr.mxu0 0.0
    %637 = vmatpush1.msra.mxu0 0.0
    %638 = vmatprep.subr.mxu0 0.0
    %639 = vmatpush1.msra.mxu0 0.0
    %640 = vmatprep.subr.mxu0 0.0
    %641 = vmatpush1.msra.mxu0 0.0
    %642 = vmatprep.subr.mxu0 0.0
    %643 = vmatpush1.msra.mxu0 0.0
    %644 = vmatprep.mubr.f32.mxu0 0.0
    %645 = vmatmul.mubr.f32.gmra.mrb[0].mxu0 0.0
    %v646 = vpop.f32.mrb[0].mxu0
    %v647 = vadd.f32 0.0, %v646
    %v648 = vpop.f32.mrb[0].mxu0
    %v649 = vadd.f32 0.0, %v648
    %650 = vdwg.mxu0
    %v651 = vadd.f32 %v441, %v576
    %v652 = vadd.f32 %v442, %v578
    %v653 = vadd.f32 %v443, %v647
    %v654 = vadd.f32 %v444, %v649
    %v655 = vxor.u32 %v651, 2147483648
    %v656 = vmul.f32 %v655, 1.442695
    %v657 = vpow.pop %v656
    %v658 = vadd.f32 %v657, 1.0
    %v659 = vrcp.pop %v658
    %v660 = vmul.f32 1.0, %v659
    %v661 = vxor.u32 %v652, 2147483648
    %v662 = vmul.f32 %v661, 1.442695
    %v663 = vpow.pop %v662
    %v664 = vadd.f32 %v663, 1.0
    %v665 = vrcp.pop %v664
    %v666 = vmul.f32 1.0, %v665
    %v667 = vtanh.pop %v653
    %v668 = vxor.u32 %v654, 2147483648
    %v669 = vmul.f32 %v668, 1.442695
    %v670 = vpow.pop %v669
    %v671 = vadd.f32 %v670, 1.0
    %v672 = vrcp.pop %v671
    %v673 = vmul.f32 1.0, %v672
    %v674 = vmul.f32 %v666, 0.0
    %v675 = vmul.f32 %v660, %v667
    %v676 = vadd.f32 %v674, %v675
    %v677 = vtanh.pop %v676
    %v678 = vmul.f32 %v673, %v677
    %v679 = vld [vmem:[#allocation2 + $0x20] sm:$0xff]
    %v680 = vld [vmem:[#allocation2 + $0x28] sm:$0xff]
    %v681 = vld [vmem:[#allocation2 + $0x30] sm:$0xff]
    %v682 = vld [vmem:[#allocation2 + $0x38] sm:$0xff]
    %683 = vmatprep.subr.mxu0 %v446
    %684 = vmatpush1.msra.mxu0 %v445
    %685 = vmatprep.subr.mxu0 %v450
    %686 = vmatpush1.msra.mxu0 %v449
    %687 = vmatprep.subr.mxu0 %v454
    %688 = vmatpush1.msra.mxu0 %v453
    %689 = vmatprep.subr.mxu0 %v458
    %690 = vmatpush1.msra.mxu0 %v457
    %691 = vmatprep.subr.mxu0 %v462
    %692 = vmatpush1.msra.mxu0 %v461
    %693 = vmatprep.subr.mxu0 %v466
    %694 = vmatpush1.msra.mxu0 %v465
    %695 = vmatprep.subr.mxu0 %v470
    %696 = vmatpush1.msra.mxu0 %v469
    %697 = vmatprep.subr.mxu0 %v474
    %698 = vmatpush1.msra.mxu0 %v473
    %699 = vmatprep.subr.mxu0 %v478
    %700 = vmatpush1.msra.mxu0 %v477
    %701 = vmatprep.subr.mxu0 %v482
    %702 = vmatpush1.msra.mxu0 %v481
    %703 = vmatprep.subr.mxu0 %v486
    %704 = vmatpush1.msra.mxu0 %v485
    %705 = vmatprep.subr.mxu0 %v490
    %706 = vmatpush1.msra.mxu0 %v489
    %707 = vmatprep.subr.mxu0 %v494
    %708 = vmatpush1.msra.mxu0 %v493
    %709 = vmatprep.subr.mxu0 %v498
    %710 = vmatpush1.msra.mxu0 %v497
    %711 = vmatprep.subr.mxu0 %v502
    %712 = vmatpush1.msra.mxu0 %v501
    %713 = vmatprep.subr.mxu0 %v506
    %714 = vmatpush1.msra.mxu0 %v505
    %715 = vmatprep.subr.mxu0 0.0
    %716 = vmatpush1.msra.mxu0 0.0
    %717 = vmatprep.subr.mxu0 0.0
    %718 = vmatpush1.msra.mxu0 0.0
    %719 = vmatprep.subr.mxu0 0.0
    %720 = vmatpush1.msra.mxu0 0.0
    %721 = vmatprep.subr.mxu0 0.0
    %722 = vmatpush1.msra.mxu0 0.0
    %723 = vmatprep.subr.mxu0 0.0
    %724 = vmatpush1.msra.mxu0 0.0
    %725 = vmatprep.subr.mxu0 0.0
    %726 = vmatpush1.msra.mxu0 0.0
    %727 = vmatprep.subr.mxu0 0.0
    %728 = vmatpush1.msra.mxu0 0.0
    %729 = vmatprep.subr.mxu0 0.0
    %730 = vmatpush1.msra.mxu0 0.0
    %731 = vmatprep.subr.mxu0 0.0
    %732 = vmatpush1.msra.mxu0 0.0
    %733 = vmatprep.subr.mxu0 0.0
    %734 = vmatpush1.msra.mxu0 0.0
    %735 = vmatprep.subr.mxu0 0.0
    %736 = vmatpush1.msra.mxu0 0.0
    %737 = vmatprep.subr.mxu0 0.0
    %738 = vmatpush1.msra.mxu0 0.0
    %739 = vmatprep.subr.mxu0 0.0
    %740 = vmatpush1.msra.mxu0 0.0
    %741 = vmatprep.subr.mxu0 0.0
    %742 = vmatpush1.msra.mxu0 0.0
    %743 = vmatprep.subr.mxu0 0.0
    %744 = vmatpush1.msra.mxu0 0.0
    %745 = vmatprep.subr.mxu0 0.0
    %746 = vmatpush1.msra.mxu0 0.0
    %747 = vmatprep.mubr.f32.mxu0 0.0
    %748 = vmatmul.mubr.f32.gmra.mrb[0].mxu0 %v678
    %v749 = vpop.f32.mrb[0].mxu0
    %v750 = vadd.f32 0.0, %v749
    %v751 = vpop.f32.mrb[0].mxu0
    %v752 = vadd.f32 0.0, %v751
    %753 = vdwg.mxu0
    %754 = vmatprep.subr.mxu0 %v448
    %755 = vmatpush1.msra.mxu0 %v447
    %756 = vmatprep.subr.mxu0 %v452
    %757 = vmatpush1.msra.mxu0 %v451
    %758 = vmatprep.subr.mxu0 %v456
    %759 = vmatpush1.msra.mxu0 %v455
    %760 = vmatprep.subr.mxu0 %v460
    %761 = vmatpush1.msra.mxu0 %v459
    %762 = vmatprep.subr.mxu0 %v464
    %763 = vmatpush1.msra.mxu0 %v463
    %764 = vmatprep.subr.mxu0 %v468
    %765 = vmatpush1.msra.mxu0 %v467
    %766 = vmatprep.subr.mxu0 %v472
    %767 = vmatpush1.msra.mxu0 %v471
    %768 = vmatprep.subr.mxu0 %v476
    %769 = vmatpush1.msra.mxu0 %v475
    %770 = vmatprep.subr.mxu0 %v480
    %771 = vmatpush1.msra.mxu0 %v479
    %772 = vmatprep.subr.mxu0 %v484
    %773 = vmatpush1.msra.mxu0 %v483
    %774 = vmatprep.subr.mxu0 %v488
    %775 = vmatpush1.msra.mxu0 %v487
    %776 = vmatprep.subr.mxu0 %v492
    %777 = vmatpush1.msra.mxu0 %v491
    %778 = vmatprep.subr.mxu0 %v496
    %779 = vmatpush1.msra.mxu0 %v495
    %780 = vmatprep.subr.mxu0 %v500
    %781 = vmatpush1.msra.mxu0 %v499
    %782 = vmatprep.subr.mxu0 %v504
    %783 = vmatpush1.msra.mxu0 %v503
    %784 = vmatprep.subr.mxu0 %v508
    %785 = vmatpush1.msra.mxu0 %v507
    %786 = vmatprep.subr.mxu0 0.0
    %787 = vmatpush1.msra.mxu0 0.0
    %788 = vmatprep.subr.mxu0 0.0
    %789 = vmatpush1.msra.mxu0 0.0
    %790 = vmatprep.subr.mxu0 0.0
    %791 = vmatpush1.msra.mxu0 0.0
    %792 = vmatprep.subr.mxu0 0.0
    %793 = vmatpush1.msra.mxu0 0.0
    %794 = vmatprep.subr.mxu0 0.0
    %795 = vmatpush1.msra.mxu0 0.0
    %796 = vmatprep.subr.mxu0 0.0
    %797 = vmatpush1.msra.mxu0 0.0
    %798 = vmatprep.subr.mxu0 0.0
    %799 = vmatpush1.msra.mxu0 0.0
    %800 = vmatprep.subr.mxu0 0.0
    %801 = vmatpush1.msra.mxu0 0.0
    %802 = vmatprep.subr.mxu0 0.0
    %803 = vmatpush1.msra.mxu0 0.0
    %804 = vmatprep.subr.mxu0 0.0
    %805 = vmatpush1.msra.mxu0 0.0
    %806 = vmatprep.subr.mxu0 0.0
    %807 = vmatpush1.msra.mxu0 0.0
    %808 = vmatprep.subr.mxu0 0.0
    %809 = vmatpush1.msra.mxu0 0.0
    %810 = vmatprep.subr.mxu0 0.0
    %811 = vmatpush1.msra.mxu0 0.0
    %812 = vmatprep.subr.mxu0 0.0
    %813 = vmatpush1.msra.mxu0 0.0
    %814 = vmatprep.subr.mxu0 0.0
    %815 = vmatpush1.msra.mxu0 0.0
    %816 = vmatprep.subr.mxu0 0.0
    %817 = vmatpush1.msra.mxu0 0.0
    %818 = vmatprep.mubr.f32.mxu0 0.0
    %819 = vmatmul.mubr.f32.gmra.mrb[0].mxu0 %v678
    %v820 = vpop.f32.mrb[0].mxu0
    %v821 = vadd.f32 0.0, %v820
    %v822 = vpop.f32.mrb[0].mxu0
    %v823 = vadd.f32 0.0, %v822
    %824 = vdwg.mxu0
    %v825 = vadd.f32 %v679, %v750
    %v826 = vadd.f32 %v680, %v752
    %v827 = vadd.f32 %v681, %v821
    %v828 = vadd.f32 %v682, %v823
    %v829 = vxor.u32 %v825, 2147483648
    %v830 = vmul.f32 %v829, 1.442695
    %v831 = vpow.pop %v830
    %v832 = vadd.f32 %v831, 1.0
    %v833 = vrcp.pop %v832
    %v834 = vmul.f32 1.0, %v833
    %v835 = vxor.u32 %v826, 2147483648
    %v836 = vmul.f32 %v835, 1.442695
    %v837 = vpow.pop %v836
    %v838 = vadd.f32 %v837, 1.0
    %v839 = vrcp.pop %v838
    %v840 = vmul.f32 1.0, %v839
    %v841 = vtanh.pop %v827
    %v842 = vxor.u32 %v828, 2147483648
    %v843 = vmul.f32 %v842, 1.442695
    %v844 = vpow.pop %v843
    %v845 = vadd.f32 %v844, 1.0
    %v846 = vrcp.pop %v845
    %v847 = vmul.f32 1.0, %v846
    %v848 = vmul.f32 %v840, %v676
    %v849 = vmul.f32 %v834, %v841
    %v850 = vadd.f32 %v848, %v849
    %v851 = vtanh.pop %v850
    %v852 = vmul.f32 %v847, %v851
    %v853 = vld [vmem:[#allocation2 + $0x40] sm:$0xff]
    %v854 = vld [vmem:[#allocation2 + $0x48] sm:$0xff]
    %v855 = vld [vmem:[#allocation2 + $0x50] sm:$0xff]
    %v856 = vld [vmem:[#allocation2 + $0x58] sm:$0xff]
    %857 = vmatprep.subr.mxu0 %v446
    %858 = vmatpush1.msra.mxu0 %v445
    %859 = vmatprep.subr.mxu0 %v450
    %860 = vmatpush1.msra.mxu0 %v449
    %861 = vmatprep.subr.mxu0 %v454
    %862 = vmatpush1.msra.mxu0 %v453
    %863 = vmatprep.subr.mxu0 %v458
    %864 = vmatpush1.msra.mxu0 %v457
    %865 = vmatprep.subr.mxu0 %v462
    %866 = vmatpush1.msra.mxu0 %v461
    %867 = vmatprep.subr.mxu0 %v466
    %868 = vmatpush1.msra.mxu0 %v465
    %869 = vmatprep.subr.mxu0 %v470
    %870 = vmatpush1.msra.mxu0 %v469
    %871 = vmatprep.subr.mxu0 %v474
    %872 = vmatpush1.msra.mxu0 %v473
    %873 = vmatprep.subr.mxu0 %v478
    %874 = vmatpush1.msra.mxu0 %v477
    %875 = vmatprep.subr.mxu0 %v482
    %876 = vmatpush1.msra.mxu0 %v481
    %877 = vmatprep.subr.mxu0 %v486
    %878 = vmatpush1.msra.mxu0 %v485
    %879 = vmatprep.subr.mxu0 %v490
    %880 = vmatpush1.msra.mxu0 %v489
    %881 = vmatprep.subr.mxu0 %v494
    %882 = vmatpush1.msra.mxu0 %v493
    %883 = vmatprep.subr.mxu0 %v498
    %884 = vmatpush1.msra.mxu0 %v497
    %885 = vmatprep.subr.mxu0 %v502
    %886 = vmatpush1.msra.mxu0 %v501
    %887 = vmatprep.subr.mxu0 %v506
    %888 = vmatpush1.msra.mxu0 %v505
    %889 = vmatprep.subr.mxu0 0.0
    %890 = vmatpush1.msra.mxu0 0.0
    %891 = vmatprep.subr.mxu0 0.0
    %892 = vmatpush1.msra.mxu0 0.0
    %893 = vmatprep.subr.mxu0 0.0
    %894 = vmatpush1.msra.mxu0 0.0
    %895 = vmatprep.subr.mxu0 0.0
    %896 = vmatpush1.msra.mxu0 0.0
    %897 = vmatprep.subr.mxu0 0.0
    %898 = vmatpush1.msra.mxu0 0.0
    %899 = vmatprep.subr.mxu0 0.0
    %900 = vmatpush1.msra.mxu0 0.0
    %901 = vmatprep.subr.mxu0 0.0
    %902 = vmatpush1.msra.mxu0 0.0
    %903 = vmatprep.subr.mxu0 0.0
    %904 = vmatpush1.msra.mxu0 0.0
    %905 = vmatprep.subr.mxu0 0.0
    %906 = vmatpush1.msra.mxu0 0.0
    %907 = vmatprep.subr.mxu0 0.0
    %908 = vmatpush1.msra.mxu0 0.0
    %909 = vmatprep.subr.mxu0 0.0
    %910 = vmatpush1.msra.mxu0 0.0
    %911 = vmatprep.subr.mxu0 0.0
    %912 = vmatpush1.msra.mxu0 0.0
    %913 = vmatprep.subr.mxu0 0.0
    %914 = vmatpush1.msra.mxu0 0.0
    %915 = vmatprep.subr.mxu0 0.0
    %916 = vmatpush1.msra.mxu0 0.0
    %917 = vmatprep.subr.mxu0 0.0
    %918 = vmatpush1.msra.mxu0 0.0
    %919 = vmatprep.subr.mxu0 0.0
    %920 = vmatpush1.msra.mxu0 0.0
    %921 = vmatprep.mubr.f32.mxu0 0.0
    %922 = vmatmul.mubr.f32.gmra.mrb[0].mxu0 %v852
    %v923 = vpop.f32.mrb[0].mxu0
    %v924 = vadd.f32 0.0, %v923
    %v925 = vpop.f32.mrb[0].mxu0
    %v926 = vadd.f32 0.0, %v925
    %927 = vdwg.mxu0
    %928 = vmatprep.subr.mxu0 %v448
    %929 = vmatpush1.msra.mxu0 %v447
    %930 = vmatprep.subr.mxu0 %v452
    %931 = vmatpush1.msra.mxu0 %v451
    %932 = vmatprep.subr.mxu0 %v456
    %933 = vmatpush1.msra.mxu0 %v455
    %934 = vmatprep.subr.mxu0 %v460
    %935 = vmatpush1.msra.mxu0 %v459
    %936 = vmatprep.subr.mxu0 %v464
    %937 = vmatpush1.msra.mxu0 %v463
    %938 = vmatprep.subr.mxu0 %v468
    %939 = vmatpush1.msra.mxu0 %v467
    %940 = vmatprep.subr.mxu0 %v472
    %941 = vmatpush1.msra.mxu0 %v471
    %942 = vmatprep.subr.mxu0 %v476
    %943 = vmatpush1.msra.mxu0 %v475
    %944 = vmatprep.subr.mxu0 %v480
    %945 = vmatpush1.msra.mxu0 %v479
    %946 = vmatprep.subr.mxu0 %v484
    %947 = vmatpush1.msra.mxu0 %v483
    %948 = vmatprep.subr.mxu0 %v488
    %949 = vmatpush1.msra.mxu0 %v487
    %950 = vmatprep.subr.mxu0 %v492
    %951 = vmatpush1.msra.mxu0 %v491
    %952 = vmatprep.subr.mxu0 %v496
    %953 = vmatpush1.msra.mxu0 %v495
    %954 = vmatprep.subr.mxu0 %v500
    %955 = vmatpush1.msra.mxu0 %v499
    %956 = vmatprep.subr.mxu0 %v504
    %957 = vmatpush1.msra.mxu0 %v503
    %958 = vmatprep.subr.mxu0 %v508
    %959 = vmatpush1.msra.mxu0 %v507
    %960 = vmatprep.subr.mxu0 0.0
    %961 = vmatpush1.msra.mxu0 0.0
    %962 = vmatprep.subr.mxu0 0.0
    %963 = vmatpush1.msra.mxu0 0.0
    %964 = vmatprep.subr.mxu0 0.0
    %965 = vmatpush1.msra.mxu0 0.0
    %966 = vmatprep.subr.mxu0 0.0
    %967 = vmatpush1.msra.mxu0 0.0
    %968 = vmatprep.subr.mxu0 0.0
    %969 = vmatpush1.msra.mxu0 0.0
    %970 = vmatprep.subr.mxu0 0.0
    %971 = vmatpush1.msra.mxu0 0.0
    %972 = vmatprep.subr.mxu0 0.0
    %973 = vmatpush1.msra.mxu0 0.0
    %974 = vmatprep.subr.mxu0 0.0
    %975 = vmatpush1.msra.mxu0 0.0
    %976 = vmatprep.subr.mxu0 0.0
    %977 = vmatpush1.msra.mxu0 0.0
    %978 = vmatprep.subr.mxu0 0.0
    %979 = vmatpush1.msra.mxu0 0.0
    %980 = vmatprep.subr.mxu0 0.0
    %981 = vmatpush1.msra.mxu0 0.0
    %982 = vmatprep.subr.mxu0 0.0
    %983 = vmatpush1.msra.mxu0 0.0
    %984 = vmatprep.subr.mxu0 0.0
    %985 = vmatpush1.msra.mxu0 0.0
    %986 = vmatprep.subr.mxu0 0.0
    %987 = vmatpush1.msra.mxu0 0.0
    %988 = vmatprep.subr.mxu0 0.0
    %989 = vmatpush1.msra.mxu0 0.0
    %990 = vmatprep.subr.mxu0 0.0
    %991 = vmatpush1.msra.mxu0 0.0
    %992 = vmatprep.mubr.f32.mxu0 0.0
    %993 = vmatmul.mubr.f32.gmra.mrb[0].mxu0 %v852
    %v994 = vpop.f32.mrb[0].mxu0
    %v995 = vadd.f32 0.0, %v994
    %v996 = vpop.f32.mrb[0].mxu0
    %v997 = vadd.f32 0.0, %v996
    %998 = vdwg.mxu0
    %v999 = vadd.f32 %v853, %v924
    %v1000 = vadd.f32 %v854, %v926
    %v1001 = vadd.f32 %v855, %v995
    %v1002 = vadd.f32 %v856, %v997
    %v1003 = vxor.u32 %v999, 2147483648
    %v1004 = vmul.f32 %v1003, 1.442695
    %v1005 = vpow.pop %v1004
    %v1006 = vadd.f32 %v1005, 1.0
    %v1007 = vrcp.pop %v1006
    %v1008 = vmul.f32 1.0, %v1007
    %v1009 = vxor.u32 %v1000, 2147483648
    %v1010 = vmul.f32 %v1009, 1.442695
    %v1011 = vpow.pop %v1010
    %v1012 = vadd.f32 %v1011, 1.0
    %v1013 = vrcp.pop %v1012
    %v1014 = vmul.f32 1.0, %v1013
    %v1015 = vtanh.pop %v1001
    %v1016 = vxor.u32 %v1002, 2147483648
    %v1017 = vmul.f32 %v1016, 1.442695
    %v1018 = vpow.pop %v1017
    %v1019 = vadd.f32 %v1018, 1.0
    %v1020 = vrcp.pop %v1019
    %v1021 = vmul.f32 1.0, %v1020
    %v1022 = vmul.f32 %v1014, %v850
    %v1023 = vmul.f32 %v1008, %v1015
    %v1024 = vadd.f32 %v1022, %v1023
    %v1025 = vtanh.pop %v1024
    %v1026 = vmul.f32 %v1021, %v1025
    %v1027 = vld [vmem:[#allocation2 + $0x60] sm:$0xff]
    %v1028 = vld [vmem:[#allocation2 + $0x68] sm:$0xff]
    %v1029 = vld [vmem:[#allocation2 + $0x70] sm:$0xff]
    %v1030 = vld [vmem:[#allocation2 + $0x78] sm:$0xff]
    %1031 = vmatprep.subr.mxu0 %v446
    %1032 = vmatpush1.msra.mxu0 %v445
    %1033 = vmatprep.subr.mxu0 %v450
    %1034 = vmatpush1.msra.mxu0 %v449
    %1035 = vmatprep.subr.mxu0 %v454
    %1036 = vmatpush1.msra.mxu0 %v453
    %1037 = vmatprep.subr.mxu0 %v458
    %1038 = vmatpush1.msra.mxu0 %v457
    %1039 = vmatprep.subr.mxu0 %v462
    %1040 = vmatpush1.msra.mxu0 %v461
    %1041 = vmatprep.subr.mxu0 %v466
    %1042 = vmatpush1.msra.mxu0 %v465
    %1043 = vmatprep.subr.mxu0 %v470
    %1044 = vmatpush1.msra.mxu0 %v469
    %1045 = vmatprep.subr.mxu0 %v474
    %1046 = vmatpush1.msra.mxu0 %v473
    %1047 = vmatprep.subr.mxu0 %v478
    %1048 = vmatpush1.msra.mxu0 %v477
    %1049 = vmatprep.subr.mxu0 %v482
    %1050 = vmatpush1.msra.mxu0 %v481
    %1051 = vmatprep.subr.mxu0 %v486
    %1052 = vmatpush1.msra.mxu0 %v485
    %1053 = vmatprep.subr.mxu0 %v490
    %1054 = vmatpush1.msra.mxu0 %v489
    %1055 = vmatprep.subr.mxu0 %v494
    %1056 = vmatpush1.msra.mxu0 %v493
    %1057 = vmatprep.subr.mxu0 %v498
    %1058 = vmatpush1.msra.mxu0 %v497
    %1059 = vmatprep.subr.mxu0 %v502
    %1060 = vmatpush1.msra.mxu0 %v501
    %1061 = vmatprep.subr.mxu0 %v506
    %1062 = vmatpush1.msra.mxu0 %v505
    %1063 = vmatprep.subr.mxu0 0.0
    %1064 = vmatpush1.msra.mxu0 0.0
    %1065 = vmatprep.subr.mxu0 0.0
    %1066 = vmatpush1.msra.mxu0 0.0
    %1067 = vmatprep.subr.mxu0 0.0
    %1068 = vmatpush1.msra.mxu0 0.0
    %1069 = vmatprep.subr.mxu0 0.0
    %1070 = vmatpush1.msra.mxu0 0.0
    %1071 = vmatprep.subr.mxu0 0.0
    %1072 = vmatpush1.msra.mxu0 0.0
    %1073 = vmatprep.subr.mxu0 0.0
    %1074 = vmatpush1.msra.mxu0 0.0
    %1075 = vmatprep.subr.mxu0 0.0
    %1076 = vmatpush1.msra.mxu0 0.0
    %1077 = vmatprep.subr.mxu0 0.0
    %1078 = vmatpush1.msra.mxu0 0.0
    %1079 = vmatprep.subr.mxu0 0.0
    %1080 = vmatpush1.msra.mxu0 0.0
    %1081 = vmatprep.subr.mxu0 0.0
    %1082 = vmatpush1.msra.mxu0 0.0
    %1083 = vmatprep.subr.mxu0 0.0
    %1084 = vmatpush1.msra.mxu0 0.0
    %1085 = vmatprep.subr.mxu0 0.0
    %1086 = vmatpush1.msra.mxu0 0.0
    %1087 = vmatprep.subr.mxu0 0.0
    %1088 = vmatpush1.msra.mxu0 0.0
    %1089 = vmatprep.subr.mxu0 0.0
    %1090 = vmatpush1.msra.mxu0 0.0
    %1091 = vmatprep.subr.mxu0 0.0
    %1092 = vmatpush1.msra.mxu0 0.0
    %1093 = vmatprep.subr.mxu0 0.0
    %1094 = vmatpush1.msra.mxu0 0.0
    %1095 = vmatprep.mubr.f32.mxu0 0.0
    %1096 = vmatmul.mubr.f32.gmra.mrb[0].mxu0 %v1026
    %v1097 = vpop.f32.mrb[0].mxu0
    %v1098 = vadd.f32 0.0, %v1097
    %v1099 = vpop.f32.mrb[0].mxu0
    %v1100 = vadd.f32 0.0, %v1099
    %1101 = vdwg.mxu0
    %1102 = vmatprep.subr.mxu0 %v448
    %1103 = vmatpush1.msra.mxu0 %v447
    %1104 = vmatprep.subr.mxu0 %v452
    %1105 = vmatpush1.msra.mxu0 %v451
    %1106 = vmatprep.subr.mxu0 %v456
    %1107 = vmatpush1.msra.mxu0 %v455
    %1108 = vmatprep.subr.mxu0 %v460
    %1109 = vmatpush1.msra.mxu0 %v459
    %1110 = vmatprep.subr.mxu0 %v464
    %1111 = vmatpush1.msra.mxu0 %v463
    %1112 = vmatprep.subr.mxu0 %v468
    %1113 = vmatpush1.msra.mxu0 %v467
    %1114 = vmatprep.subr.mxu0 %v472
    %1115 = vmatpush1.msra.mxu0 %v471
    %1116 = vmatprep.subr.mxu0 %v476
    %1117 = vmatpush1.msra.mxu0 %v475
    %1118 = vmatprep.subr.mxu0 %v480
    %1119 = vmatpush1.msra.mxu0 %v479
    %1120 = vmatprep.subr.mxu0 %v484
    %1121 = vmatpush1.msra.mxu0 %v483
    %1122 = vmatprep.subr.mxu0 %v488
    %1123 = vmatpush1.msra.mxu0 %v487
    %1124 = vmatprep.subr.mxu0 %v492
    %1125 = vmatpush1.msra.mxu0 %v491
    %1126 = vmatprep.subr.mxu0 %v496
    %1127 = vmatpush1.msra.mxu0 %v495
    %1128 = vmatprep.subr.mxu0 %v500
    %1129 = vmatpush1.msra.mxu0 %v499
    %1130 = vmatprep.subr.mxu0 %v504
    %1131 = vmatpush1.msra.mxu0 %v503
    %1132 = vmatprep.subr.mxu0 %v508
    %1133 = vmatpush1.msra.mxu0 %v507
    %1134 = vmatprep.subr.mxu0 0.0
    %1135 = vmatpush1.msra.mxu0 0.0
    %1136 = vmatprep.subr.mxu0 0.0
    %1137 = vmatpush1.msra.mxu0 0.0
    %1138 = vmatprep.subr.mxu0 0.0
    %1139 = vmatpush1.msra.mxu0 0.0
    %1140 = vmatprep.subr.mxu0 0.0
    %1141 = vmatpush1.msra.mxu0 0.0
    %1142 = vmatprep.subr.mxu0 0.0
    %1143 = vmatpush1.msra.mxu0 0.0
    %1144 = vmatprep.subr.mxu0 0.0
    %1145 = vmatpush1.msra.mxu0 0.0
    %1146 = vmatprep.subr.mxu0 0.0
    %1147 = vmatpush1.msra.mxu0 0.0
    %1148 = vmatprep.subr.mxu0 0.0
    %1149 = vmatpush1.msra.mxu0 0.0
    %1150 = vmatprep.subr.mxu0 0.0
    %1151 = vmatpush1.msra.mxu0 0.0
    %1152 = vmatprep.subr.mxu0 0.0
    %1153 = vmatpush1.msra.mxu0 0.0
    %1154 = vmatprep.subr.mxu0 0.0
    %1155 = vmatpush1.msra.mxu0 0.0
    %1156 = vmatprep.subr.mxu0 0.0
    %1157 = vmatpush1.msra.mxu0 0.0
    %1158 = vmatprep.subr.mxu0 0.0
    %1159 = vmatpush1.msra.mxu0 0.0
    %1160 = vmatprep.subr.mxu0 0.0
    %1161 = vmatpush1.msra.mxu0 0.0
    %1162 = vmatprep.subr.mxu0 0.0
    %1163 = vmatpush1.msra.mxu0 0.0
    %1164 = vmatprep.subr.mxu0 0.0
    %1165 = vmatpush1.msra.mxu0 0.0
    %1166 = vmatprep.mubr.f32.mxu0 0.0
    %1167 = vmatmul.mubr.f32.gmra.mrb[0].mxu0 %v1026
    %v1168 = vpop.f32.mrb[0].mxu0
    %v1169 = vadd.f32 0.0, %v1168
    %v1170 = vpop.f32.mrb[0].mxu0
    %v1171 = vadd.f32 0.0, %v1170
    %1172 = vdwg.mxu0
    %v1173 = vadd.f32 %v1027, %v1098
    %v1174 = vadd.f32 %v1028, %v1100
    %v1175 = vadd.f32 %v1029, %v1169
    %v1176 = vadd.f32 %v1030, %v1171
    %v1177 = vxor.u32 %v1173, 2147483648
    %v1178 = vmul.f32 %v1177, 1.442695
    %v1179 = vpow.pop %v1178
    %v1180 = vadd.f32 %v1179, 1.0
    %v1181 = vrcp.pop %v1180
    %v1182 = vmul.f32 1.0, %v1181
    %v1183 = vxor.u32 %v1174, 2147483648
    %v1184 = vmul.f32 %v1183, 1.442695
    %v1185 = vpow.pop %v1184
    %v1186 = vadd.f32 %v1185, 1.0
    %v1187 = vrcp.pop %v1186
    %v1188 = vmul.f32 1.0, %v1187
    %v1189 = vtanh.pop %v1175
    %v1190 = vxor.u32 %v1176, 2147483648
    %v1191 = vmul.f32 %v1190, 1.442695
    %v1192 = vpow.pop %v1191
    %v1193 = vadd.f32 %v1192, 1.0
    %v1194 = vrcp.pop %v1193
    %v1195 = vmul.f32 1.0, %v1194
    %v1196 = vmul.f32 %v1188, %v1024
    %v1197 = vmul.f32 %v1182, %v1189
    %v1198 = vadd.f32 %v1196, %v1197
    %v1199 = vtanh.pop %v1198
    %v1200 = vmul.f32 %v1195, %v1199
    %v1201 = vld [vmem:[#allocation2 + $0x80] sm:$0xff]
    %v1202 = vld [vmem:[#allocation2 + $0x88] sm:$0xff]
    %v1203 = vld [vmem:[#allocation2 + $0x90] sm:$0xff]
    %v1204 = vld [vmem:[#allocation2 + $0x98] sm:$0xff]
    %1205 = vmatprep.subr.mxu0 %v446
    %1206 = vmatpush1.msra.mxu0 %v445
    %1207 = vmatprep.subr.mxu0 %v450
    %1208 = vmatpush1.msra.mxu0 %v449
    %1209 = vmatprep.subr.mxu0 %v454
    %1210 = vmatpush1.msra.mxu0 %v453
    %1211 = vmatprep.subr.mxu0 %v458
    %1212 = vmatpush1.msra.mxu0 %v457
    %1213 = vmatprep.subr.mxu0 %v462
    %1214 = vmatpush1.msra.mxu0 %v461
    %1215 = vmatprep.subr.mxu0 %v466
    %1216 = vmatpush1.msra.mxu0 %v465
    %1217 = vmatprep.subr.mxu0 %v470
    %1218 = vmatpush1.msra.mxu0 %v469
    %1219 = vmatprep.subr.mxu0 %v474
    %1220 = vmatpush1.msra.mxu0 %v473
    %1221 = vmatprep.subr.mxu0 %v478
    %1222 = vmatpush1.msra.mxu0 %v477
    %1223 = vmatprep.subr.mxu0 %v482
    %1224 = vmatpush1.msra.mxu0 %v481
    %1225 = vmatprep.subr.mxu0 %v486
    %1226 = vmatpush1.msra.mxu0 %v485
    %1227 = vmatprep.subr.mxu0 %v490
    %1228 = vmatpush1.msra.mxu0 %v489
    %1229 = vmatprep.subr.mxu0 %v494
    %1230 = vmatpush1.msra.mxu0 %v493
    %1231 = vmatprep.subr.mxu0 %v498
    %1232 = vmatpush1.msra.mxu0 %v497
    %1233 = vmatprep.subr.mxu0 %v502
    %1234 = vmatpush1.msra.mxu0 %v501
    %1235 = vmatprep.subr.mxu0 %v506
    %1236 = vmatpush1.msra.mxu0 %v505
    %1237 = vmatprep.subr.mxu0 0.0
    %1238 = vmatpush1.msra.mxu0 0.0
    %1239 = vmatprep.subr.mxu0 0.0
    %1240 = vmatpush1.msra.mxu0 0.0
    %1241 = vmatprep.subr.mxu0 0.0
    %1242 = vmatpush1.msra.mxu0 0.0
    %1243 = vmatprep.subr.mxu0 0.0
    %1244 = vmatpush1.msra.mxu0 0.0
    %1245 = vmatprep.subr.mxu0 0.0
    %1246 = vmatpush1.msra.mxu0 0.0
    %1247 = vmatprep.subr.mxu0 0.0
    %1248 = vmatpush1.msra.mxu0 0.0
    %1249 = vmatprep.subr.mxu0 0.0
    %1250 = vmatpush1.msra.mxu0 0.0
    %1251 = vmatprep.subr.mxu0 0.0
    %1252 = vmatpush1.msra.mxu0 0.0
    %1253 = vmatprep.subr.mxu0 0.0
    %1254 = vmatpush1.msra.mxu0 0.0
    %1255 = vmatprep.subr.mxu0 0.0
    %1256 = vmatpush1.msra.mxu0 0.0
    %1257 = vmatprep.subr.mxu0 0.0
    %1258 = vmatpush1.msra.mxu0 0.0
    %1259 = vmatprep.subr.mxu0 0.0
    %1260 = vmatpush1.msra.mxu0 0.0
    %1261 = vmatprep.subr.mxu0 0.0
    %1262 = vmatpush1.msra.mxu0 0.0
    %1263 = vmatprep.subr.mxu0 0.0
    %1264 = vmatpush1.msra.mxu0 0.0
    %1265 = vmatprep.subr.mxu0 0.0
    %1266 = vmatpush1.msra.mxu0 0.0
    %1267 = vmatprep.subr.mxu0 0.0
    %1268 = vmatpush1.msra.mxu0 0.0
    %1269 = vmatprep.mubr.f32.mxu0 0.0
    %1270 = vmatmul.mubr.f32.gmra.mrb[0].mxu0 %v1200
    %v1271 = vpop.f32.mrb[0].mxu0
    %v1272 = vadd.f32 0.0, %v1271
    %v1273 = vpop.f32.mrb[0].mxu0
    %v1274 = vadd.f32 0.0, %v1273
    %1275 = vdwg.mxu0
    %1276 = vmatprep.subr.mxu0 %v448
    %1277 = vmatpush1.msra.mxu0 %v447
    %1278 = vmatprep.subr.mxu0 %v452
    %1279 = vmatpush1.msra.mxu0 %v451
    %1280 = vmatprep.subr.mxu0 %v456
    %1281 = vmatpush1.msra.mxu0 %v455
    %1282 = vmatprep.subr.mxu0 %v460
    %1283 = vmatpush1.msra.mxu0 %v459
    %1284 = vmatprep.subr.mxu0 %v464
    %1285 = vmatpush1.msra.mxu0 %v463
    %1286 = vmatprep.subr.mxu0 %v468
    %1287 = vmatpush1.msra.mxu0 %v467
    %1288 = vmatprep.subr.mxu0 %v472
    %1289 = vmatpush1.msra.mxu0 %v471
    %1290 = vmatprep.subr.mxu0 %v476
    %1291 = vmatpush1.msra.mxu0 %v475
    %1292 = vmatprep.subr.mxu0 %v480
    %1293 = vmatpush1.msra.mxu0 %v479
    %1294 = vmatprep.subr.mxu0 %v484
    %1295 = vmatpush1.msra.mxu0 %v483
    %1296 = vmatprep.subr.mxu0 %v488
    %1297 = vmatpush1.msra.mxu0 %v487
    %1298 = vmatprep.subr.mxu0 %v492
    %1299 = vmatpush1.msra.mxu0 %v491
    %1300 = vmatprep.subr.mxu0 %v496
    %1301 = vmatpush1.msra.mxu0 %v495
    %1302 = vmatprep.subr.mxu0 %v500
    %1303 = vmatpush1.msra.mxu0 %v499
    %1304 = vmatprep.subr.mxu0 %v504
    %1305 = vmatpush1.msra.mxu0 %v503
    %1306 = vmatprep.subr.mxu0 %v508
    %1307 = vmatpush1.msra.mxu0 %v507
    %1308 = vmatprep.subr.mxu0 0.0
    %1309 = vmatpush1.msra.mxu0 0.0
    %1310 = vmatprep.subr.mxu0 0.0
    %1311 = vmatpush1.msra.mxu0 0.0
    %1312 = vmatprep.subr.mxu0 0.0
    %1313 = vmatpush1.msra.mxu0 0.0
    %1314 = vmatprep.subr.mxu0 0.0
    %1315 = vmatpush1.msra.mxu0 0.0
    %1316 = vmatprep.subr.mxu0 0.0
    %1317 = vmatpush1.msra.mxu0 0.0
    %1318 = vmatprep.subr.mxu0 0.0
    %1319 = vmatpush1.msra.mxu0 0.0
    %1320 = vmatprep.subr.mxu0 0.0
    %1321 = vmatpush1.msra.mxu0 0.0
    %1322 = vmatprep.subr.mxu0 0.0
    %1323 = vmatpush1.msra.mxu0 0.0
    %1324 = vmatprep.subr.mxu0 0.0
    %1325 = vmatpush1.msra.mxu0 0.0
    %1326 = vmatprep.subr.mxu0 0.0
    %1327 = vmatpush1.msra.mxu0 0.0
    %1328 = vmatprep.subr.mxu0 0.0
    %1329 = vmatpush1.msra.mxu0 0.0
    %1330 = vmatprep.subr.mxu0 0.0
    %1331 = vmatpush1.msra.mxu0 0.0
    %1332 = vmatprep.subr.mxu0 0.0
    %1333 = vmatpush1.msra.mxu0 0.0
    %1334 = vmatprep.subr.mxu0 0.0
    %1335 = vmatpush1.msra.mxu0 0.0
    %1336 = vmatprep.subr.mxu0 0.0
    %1337 = vmatpush1.msra.mxu0 0.0
    %1338 = vmatprep.subr.mxu0 0.0
    %1339 = vmatpush1.msra.mxu0 0.0
    %1340 = vmatprep.mubr.f32.mxu0 0.0
    %1341 = vmatmul.mubr.f32.gmra.mrb[0].mxu0 %v1200
    %v1342 = vpop.f32.mrb[0].mxu0
    %v1343 = vadd.f32 0.0, %v1342
    %v1344 = vpop.f32.mrb[0].mxu0
    %v1345 = vadd.f32 0.0, %v1344
    %1346 = vdwg.mxu0
    %v1347 = vadd.f32 %v1201, %v1272
    %v1348 = vadd.f32 %v1202, %v1274
    %v1349 = vadd.f32 %v1203, %v1343
    %v1350 = vadd.f32 %v1204, %v1345
    %v1351 = vxor.u32 %v1347, 2147483648
    %v1352 = vmul.f32 %v1351, 1.442695
    %v1353 = vpow.pop %v1352
    %v1354 = vadd.f32 %v1353, 1.0
    %v1355 = vrcp.pop %v1354
    %v1356 = vmul.f32 1.0, %v1355
    %v1357 = vxor.u32 %v1348, 2147483648
    %v1358 = vmul.f32 %v1357, 1.442695
    %v1359 = vpow.pop %v1358
    %v1360 = vadd.f32 %v1359, 1.0
    %v1361 = vrcp.pop %v1360
    %v1362 = vmul.f32 1.0, %v1361
    %v1363 = vtanh.pop %v1349
    %v1364 = vxor.u32 %v1350, 2147483648
    %v1365 = vmul.f32 %v1364, 1.442695
    %v1366 = vpow.pop %v1365
    %v1367 = vadd.f32 %v1366, 1.0
    %v1368 = vrcp.pop %v1367
    %v1369 = vmul.f32 1.0, %v1368
    %v1370 = vmul.f32 %v1362, %v1198
    %v1371 = vmul.f32 %v1356, %v1363
    %v1372 = vadd.f32 %v1370, %v1371
    %v1373 = vtanh.pop %v1372
    %v1374 = vmul.f32 %v1369, %v1373
    %v1375 = vld [vmem:[#allocation2 + $0xa0] sm:$0xff]
    %v1376 = vld [vmem:[#allocation2 + $0xa8] sm:$0xff]
    %v1377 = vld [vmem:[#allocation2 + $0xb0] sm:$0xff]
    %v1378 = vld [vmem:[#allocation2 + $0xb8] sm:$0xff]
    %1379 = vmatprep.subr.mxu0 %v446
    %1380 = vmatpush1.msra.mxu0 %v445
    %1381 = vmatprep.subr.mxu0 %v450
    %1382 = vmatpush1.msra.mxu0 %v449
    %1383 = vmatprep.subr.mxu0 %v454
    %1384 = vmatpush1.msra.mxu0 %v453
    %1385 = vmatprep.subr.mxu0 %v458
    %1386 = vmatpush1.msra.mxu0 %v457
    %1387 = vmatprep.subr.mxu0 %v462
    %1388 = vmatpush1.msra.mxu0 %v461
    %1389 = vmatprep.subr.mxu0 %v466
    %1390 = vmatpush1.msra.mxu0 %v465
    %1391 = vmatprep.subr.mxu0 %v470
    %1392 = vmatpush1.msra.mxu0 %v469
    %1393 = vmatprep.subr.mxu0 %v474
    %1394 = vmatpush1.msra.mxu0 %v473
    %1395 = vmatprep.subr.mxu0 %v478
    %1396 = vmatpush1.msra.mxu0 %v477
    %1397 = vmatprep.subr.mxu0 %v482
    %1398 = vmatpush1.msra.mxu0 %v481
    %1399 = vmatprep.subr.mxu0 %v486
    %1400 = vmatpush1.msra.mxu0 %v485
    %1401 = vmatprep.subr.mxu0 %v490
    %1402 = vmatpush1.msra.mxu0 %v489
    %1403 = vmatprep.subr.mxu0 %v494
    %1404 = vmatpush1.msra.mxu0 %v493
    %1405 = vmatprep.subr.mxu0 %v498
    %1406 = vmatpush1.msra.mxu0 %v497
    %1407 = vmatprep.subr.mxu0 %v502
    %1408 = vmatpush1.msra.mxu0 %v501
    %1409 = vmatprep.subr.mxu0 %v506
    %1410 = vmatpush1.msra.mxu0 %v505
    %1411 = vmatprep.subr.mxu0 0.0
    %1412 = vmatpush1.msra.mxu0 0.0
    %1413 = vmatprep.subr.mxu0 0.0
    %1414 = vmatpush1.msra.mxu0 0.0
    %1415 = vmatprep.subr.mxu0 0.0
    %1416 = vmatpush1.msra.mxu0 0.0
    %1417 = vmatprep.subr.mxu0 0.0
    %1418 = vmatpush1.msra.mxu0 0.0
    %1419 = vmatprep.subr.mxu0 0.0
    %1420 = vmatpush1.msra.mxu0 0.0
    %1421 = vmatprep.subr.mxu0 0.0
    %1422 = vmatpush1.msra.mxu0 0.0
    %1423 = vmatprep.subr.mxu0 0.0
    %1424 = vmatpush1.msra.mxu0 0.0
    %1425 = vmatprep.subr.mxu0 0.0
    %1426 = vmatpush1.msra.mxu0 0.0
    %1427 = vmatprep.subr.mxu0 0.0
    %1428 = vmatpush1.msra.mxu0 0.0
    %1429 = vmatprep.subr.mxu0 0.0
    %1430 = vmatpush1.msra.mxu0 0.0
    %1431 = vmatprep.subr.mxu0 0.0
    %1432 = vmatpush1.msra.mxu0 0.0
    %1433 = vmatprep.subr.mxu0 0.0
    %1434 = vmatpush1.msra.mxu0 0.0
    %1435 = vmatprep.subr.mxu0 0.0
    %1436 = vmatpush1.msra.mxu0 0.0
    %1437 = vmatprep.subr.mxu0 0.0
    %1438 = vmatpush1.msra.mxu0 0.0
    %1439 = vmatprep.subr.mxu0 0.0
    %1440 = vmatpush1.msra.mxu0 0.0
    %1441 = vmatprep.subr.mxu0 0.0
    %1442 = vmatpush1.msra.mxu0 0.0
    %1443 = vmatprep.mubr.f32.mxu0 0.0
    %1444 = vmatmul.mubr.f32.gmra.mrb[0].mxu0 %v1374
    %v1445 = vpop.f32.mrb[0].mxu0
    %v1446 = vadd.f32 0.0, %v1445
    %v1447 = vpop.f32.mrb[0].mxu0
    %v1448 = vadd.f32 0.0, %v1447
    %1449 = vdwg.mxu0
    %1450 = vmatprep.subr.mxu0 %v448
    %1451 = vmatpush1.msra.mxu0 %v447
    %1452 = vmatprep.subr.mxu0 %v452
    %1453 = vmatpush1.msra.mxu0 %v451
    %1454 = vmatprep.subr.mxu0 %v456
    %1455 = vmatpush1.msra.mxu0 %v455
    %1456 = vmatprep.subr.mxu0 %v460
    %1457 = vmatpush1.msra.mxu0 %v459
    %1458 = vmatprep.subr.mxu0 %v464
    %1459 = vmatpush1.msra.mxu0 %v463
    %1460 = vmatprep.subr.mxu0 %v468
    %1461 = vmatpush1.msra.mxu0 %v467
    %1462 = vmatprep.subr.mxu0 %v472
    %1463 = vmatpush1.msra.mxu0 %v471
    %1464 = vmatprep.subr.mxu0 %v476
    %1465 = vmatpush1.msra.mxu0 %v475
    %1466 = vmatprep.subr.mxu0 %v480
    %1467 = vmatpush1.msra.mxu0 %v479
    %1468 = vmatprep.subr.mxu0 %v484
    %1469 = vmatpush1.msra.mxu0 %v483
    %1470 = vmatprep.subr.mxu0 %v488
    %1471 = vmatpush1.msra.mxu0 %v487
    %1472 = vmatprep.subr.mxu0 %v492
    %1473 = vmatpush1.msra.mxu0 %v491
    %1474 = vmatprep.subr.mxu0 %v496
    %1475 = vmatpush1.msra.mxu0 %v495
    %1476 = vmatprep.subr.mxu0 %v500
    %1477 = vmatpush1.msra.mxu0 %v499
    %1478 = vmatprep.subr.mxu0 %v504
    %1479 = vmatpush1.msra.mxu0 %v503
    %1480 = vmatprep.subr.mxu0 %v508
    %1481 = vmatpush1.msra.mxu0 %v507
    %1482 = vmatprep.subr.mxu0 0.0
    %1483 = vmatpush1.msra.mxu0 0.0
    %1484 = vmatprep.subr.mxu0 0.0
    %1485 = vmatpush1.msra.mxu0 0.0
    %1486 = vmatprep.subr.mxu0 0.0
    %1487 = vmatpush1.msra.mxu0 0.0
    %1488 = vmatprep.subr.mxu0 0.0
    %1489 = vmatpush1.msra.mxu0 0.0
    %1490 = vmatprep.subr.mxu0 0.0
    %1491 = vmatpush1.msra.mxu0 0.0
    %1492 = vmatprep.subr.mxu0 0.0
    %1493 = vmatpush1.msra.mxu0 0.0
    %1494 = vmatprep.subr.mxu0 0.0
    %1495 = vmatpush1.msra.mxu0 0.0
    %1496 = vmatprep.subr.mxu0 0.0
    %1497 = vmatpush1.msra.mxu0 0.0
    %1498 = vmatprep.subr.mxu0 0.0
    %1499 = vmatpush1.msra.mxu0 0.0
    %1500 = vmatprep.subr.mxu0 0.0
    %1501 = vmatpush1.msra.mxu0 0.0
    %1502 = vmatprep.subr.mxu0 0.0
    %1503 = vmatpush1.msra.mxu0 0.0
    %1504 = vmatprep.subr.mxu0 0.0
    %1505 = vmatpush1.msra.mxu0 0.0
    %1506 = vmatprep.subr.mxu0 0.0
    %1507 = vmatpush1.msra.mxu0 0.0
    %1508 = vmatprep.subr.mxu0 0.0
    %1509 = vmatpush1.msra.mxu0 0.0
    %1510 = vmatprep.subr.mxu0 0.0
    %1511 = vmatpush1.msra.mxu0 0.0
    %1512 = vmatprep.subr.mxu0 0.0
    %1513 = vmatpush1.msra.mxu0 0.0
    %1514 = vmatprep.mubr.f32.mxu0 0.0
    %1515 = vmatmul.mubr.f32.gmra.mrb[0].mxu0 %v1374
    %v1516 = vpop.f32.mrb[0].mxu0
    %v1517 = vadd.f32 0.0, %v1516
    %v1518 = vpop.f32.mrb[0].mxu0
    %v1519 = vadd.f32 0.0, %v1518
    %1520 = vdwg.mxu0
    %v1521 = vadd.f32 %v1375, %v1446
    %v1522 = vadd.f32 %v1376, %v1448
    %v1523 = vadd.f32 %v1377, %v1517
    %v1524 = vadd.f32 %v1378, %v1519
    %v1525 = vxor.u32 %v1521, 2147483648
    %v1526 = vmul.f32 %v1525, 1.442695
    %v1527 = vpow.pop %v1526
    %v1528 = vadd.f32 %v1527, 1.0
    %v1529 = vrcp.pop %v1528
    %v1530 = vmul.f32 1.0, %v1529
    %v1531 = vxor.u32 %v1522, 2147483648
    %v1532 = vmul.f32 %v1531, 1.442695
    %v1533 = vpow.pop %v1532
    %v1534 = vadd.f32 %v1533, 1.0
    %v1535 = vrcp.pop %v1534
    %v1536 = vmul.f32 1.0, %v1535
    %v1537 = vtanh.pop %v1523
    %v1538 = vxor.u32 %v1524, 2147483648
    %v1539 = vmul.f32 %v1538, 1.442695
    %v1540 = vpow.pop %v1539
    %v1541 = vadd.f32 %v1540, 1.0
    %v1542 = vrcp.pop %v1541
    %v1543 = vmul.f32 1.0, %v1542
    %v1544 = vmul.f32 %v1536, %v1372
    %v1545 = vmul.f32 %v1530, %v1537
    %v1546 = vadd.f32 %v1544, %v1545
    %v1547 = vtanh.pop %v1546
    %v1548 = vmul.f32 %v1543, %v1547
    %v1549 = vld [vmem:[#allocation2 + $0xc0] sm:$0xff]
    %v1550 = vld [vmem:[#allocation2 + $0xc8] sm:$0xff]
    %v1551 = vld [vmem:[#allocation2 + $0xd0] sm:$0xff]
    %v1552 = vld [vmem:[#allocation2 + $0xd8] sm:$0xff]
    %1553 = vmatprep.subr.mxu0 %v446
    %1554 = vmatpush1.msra.mxu0 %v445
    %1555 = vmatprep.subr.mxu0 %v450
    %1556 = vmatpush1.msra.mxu0 %v449
    %1557 = vmatprep.subr.mxu0 %v454
    %1558 = vmatpush1.msra.mxu0 %v453
    %1559 = vmatprep.subr.mxu0 %v458
    %1560 = vmatpush1.msra.mxu0 %v457
    %1561 = vmatprep.subr.mxu0 %v462
    %1562 = vmatpush1.msra.mxu0 %v461
    %1563 = vmatprep.subr.mxu0 %v466
    %1564 = vmatpush1.msra.mxu0 %v465
    %1565 = vmatprep.subr.mxu0 %v470
    %1566 = vmatpush1.msra.mxu0 %v469
    %1567 = vmatprep.subr.mxu0 %v474
    %1568 = vmatpush1.msra.mxu0 %v473
    %1569 = vmatprep.subr.mxu0 %v478
    %1570 = vmatpush1.msra.mxu0 %v477
    %1571 = vmatprep.subr.mxu0 %v482
    %1572 = vmatpush1.msra.mxu0 %v481
    %1573 = vmatprep.subr.mxu0 %v486
    %1574 = vmatpush1.msra.mxu0 %v485
    %1575 = vmatprep.subr.mxu0 %v490
    %1576 = vmatpush1.msra.mxu0 %v489
    %1577 = vmatprep.subr.mxu0 %v494
    %1578 = vmatpush1.msra.mxu0 %v493
    %1579 = vmatprep.subr.mxu0 %v498
    %1580 = vmatpush1.msra.mxu0 %v497
    %1581 = vmatprep.subr.mxu0 %v502
    %1582 = vmatpush1.msra.mxu0 %v501
    %1583 = vmatprep.subr.mxu0 %v506
    %1584 = vmatpush1.msra.mxu0 %v505
    %1585 = vmatprep.subr.mxu0 0.0
    %1586 = vmatpush1.msra.mxu0 0.0
    %1587 = vmatprep.subr.mxu0 0.0
    %1588 = vmatpush1.msra.mxu0 0.0
    %1589 = vmatprep.subr.mxu0 0.0
    %1590 = vmatpush1.msra.mxu0 0.0
    %1591 = vmatprep.subr.mxu0 0.0
    %1592 = vmatpush1.msra.mxu0 0.0
    %1593 = vmatprep.subr.mxu0 0.0
    %1594 = vmatpush1.msra.mxu0 0.0
    %1595 = vmatprep.subr.mxu0 0.0
    %1596 = vmatpush1.msra.mxu0 0.0
    %1597 = vmatprep.subr.mxu0 0.0
    %1598 = vmatpush1.msra.mxu0 0.0
    %1599 = vmatprep.subr.mxu0 0.0
    %1600 = vmatpush1.msra.mxu0 0.0
    %1601 = vmatprep.subr.mxu0 0.0
    %1602 = vmatpush1.msra.mxu0 0.0
    %1603 = vmatprep.subr.mxu0 0.0
    %1604 = vmatpush1.msra.mxu0 0.0
    %1605 = vmatprep.subr.mxu0 0.0
    %1606 = vmatpush1.msra.mxu0 0.0
    %1607 = vmatprep.subr.mxu0 0.0
    %1608 = vmatpush1.msra.mxu0 0.0
    %1609 = vmatprep.subr.mxu0 0.0
    %1610 = vmatpush1.msra.mxu0 0.0
    %1611 = vmatprep.subr.mxu0 0.0
    %1612 = vmatpush1.msra.mxu0 0.0
    %1613 = vmatprep.subr.mxu0 0.0
    %1614 = vmatpush1.msra.mxu0 0.0
    %1615 = vmatprep.subr.mxu0 0.0
    %1616 = vmatpush1.msra.mxu0 0.0
    %1617 = vmatprep.mubr.f32.mxu0 0.0
    %1618 = vmatmul.mubr.f32.gmra.mrb[0].mxu0 %v1548
    %v1619 = vpop.f32.mrb[0].mxu0
    %v1620 = vadd.f32 0.0, %v1619
    %v1621 = vpop.f32.mrb[0].mxu0
    %v1622 = vadd.f32 0.0, %v1621
    %1623 = vdwg.mxu0
    %1624 = vmatprep.subr.mxu0 %v448
    %1625 = vmatpush1.msra.mxu0 %v447
    %1626 = vmatprep.subr.mxu0 %v452
    %1627 = vmatpush1.msra.mxu0 %v451
    %1628 = vmatprep.subr.mxu0 %v456
    %1629 = vmatpush1.msra.mxu0 %v455
    %1630 = vmatprep.subr.mxu0 %v460
    %1631 = vmatpush1.msra.mxu0 %v459
    %1632 = vmatprep.subr.mxu0 %v464
    %1633 = vmatpush1.msra.mxu0 %v463
    %1634 = vmatprep.subr.mxu0 %v468
    %1635 = vmatpush1.msra.mxu0 %v467
    %1636 = vmatprep.subr.mxu0 %v472
    %1637 = vmatpush1.msra.mxu0 %v471
    %1638 = vmatprep.subr.mxu0 %v476
    %1639 = vmatpush1.msra.mxu0 %v475
    %1640 = vmatprep.subr.mxu0 %v480
    %1641 = vmatpush1.msra.mxu0 %v479
    %1642 = vmatprep.subr.mxu0 %v484
    %1643 = vmatpush1.msra.mxu0 %v483
    %1644 = vmatprep.subr.mxu0 %v488
    %1645 = vmatpush1.msra.mxu0 %v487
    %1646 = vmatprep.subr.mxu0 %v492
    %1647 = vmatpush1.msra.mxu0 %v491
    %1648 = vmatprep.subr.mxu0 %v496
    %1649 = vmatpush1.msra.mxu0 %v495
    %1650 = vmatprep.subr.mxu0 %v500
    %1651 = vmatpush1.msra.mxu0 %v499
    %1652 = vmatprep.subr.mxu0 %v504
    %1653 = vmatpush1.msra.mxu0 %v503
    %1654 = vmatprep.subr.mxu0 %v508
    %1655 = vmatpush1.msra.mxu0 %v507
    %1656 = vmatprep.subr.mxu0 0.0
    %1657 = vmatpush1.msra.mxu0 0.0
    %1658 = vmatprep.subr.mxu0 0.0
    %1659 = vmatpush1.msra.mxu0 0.0
    %1660 = vmatprep.subr.mxu0 0.0
    %1661 = vmatpush1.msra.mxu0 0.0
    %1662 = vmatprep.subr.mxu0 0.0
    %1663 = vmatpush1.msra.mxu0 0.0
    %1664 = vmatprep.subr.mxu0 0.0
    %1665 = vmatpush1.msra.mxu0 0.0
    %1666 = vmatprep.subr.mxu0 0.0
    %1667 = vmatpush1.msra.mxu0 0.0
    %1668 = vmatprep.subr.mxu0 0.0
    %1669 = vmatpush1.msra.mxu0 0.0
    %1670 = vmatprep.subr.mxu0 0.0
    %1671 = vmatpush1.msra.mxu0 0.0
    %1672 = vmatprep.subr.mxu0 0.0
    %1673 = vmatpush1.msra.mxu0 0.0
    %1674 = vmatprep.subr.mxu0 0.0
    %1675 = vmatpush1.msra.mxu0 0.0
    %1676 = vmatprep.subr.mxu0 0.0
    %1677 = vmatpush1.msra.mxu0 0.0
    %1678 = vmatprep.subr.mxu0 0.0
    %1679 = vmatpush1.msra.mxu0 0.0
    %1680 = vmatprep.subr.mxu0 0.0
    %1681 = vmatpush1.msra.mxu0 0.0
    %1682 = vmatprep.subr.mxu0 0.0
    %1683 = vmatpush1.msra.mxu0 0.0
    %1684 = vmatprep.subr.mxu0 0.0
    %1685 = vmatpush1.msra.mxu0 0.0
    %1686 = vmatprep.subr.mxu0 0.0
    %1687 = vmatpush1.msra.mxu0 0.0
    %1688 = vmatprep.mubr.f32.mxu0 0.0
    %1689 = vmatmul.mubr.f32.gmra.mrb[0].mxu0 %v1548
    %v1690 = vpop.f32.mrb[0].mxu0
    %v1691 = vadd.f32 0.0, %v1690
    %v1692 = vpop.f32.mrb[0].mxu0
    %v1693 = vadd.f32 0.0, %v1692
    %1694 = vdwg.mxu0
    %v1695 = vadd.f32 %v1549, %v1620
    %v1696 = vadd.f32 %v1550, %v1622
    %v1697 = vadd.f32 %v1551, %v1691
    %v1698 = vadd.f32 %v1552, %v1693
    %v1699 = vxor.u32 %v1695, 2147483648
    %v1700 = vmul.f32 %v1699, 1.442695
    %v1701 = vpow.pop %v1700
    %v1702 = vadd.f32 %v1701, 1.0
    %v1703 = vrcp.pop %v1702
    %v1704 = vmul.f32 1.0, %v1703
    %v1705 = vxor.u32 %v1696, 2147483648
    %v1706 = vmul.f32 %v1705, 1.442695
    %v1707 = vpow.pop %v1706
    %v1708 = vadd.f32 %v1707, 1.0
    %v1709 = vrcp.pop %v1708
    %v1710 = vmul.f32 1.0, %v1709
    %v1711 = vtanh.pop %v1697
    %v1712 = vxor.u32 %v1698, 2147483648
    %v1713 = vmul.f32 %v1712, 1.442695
    %v1714 = vpow.pop %v1713
    %v1715 = vadd.f32 %v1714, 1.0
    %v1716 = vrcp.pop %v1715
    %v1717 = vmul.f32 1.0, %v1716
    %v1718 = vmul.f32 %v1710, %v1546
    %v1719 = vmul.f32 %v1704, %v1711
    %v1720 = vadd.f32 %v1718, %v1719
    %v1721 = vtanh.pop %v1720
    %v1722 = vmul.f32 %v1717, %v1721
    %v1723 = vld [vmem:[#allocation2 + $0xe0] sm:$0xff]
    %v1724 = vld [vmem:[#allocation2 + $0xe8] sm:$0xff]
    %v1725 = vld [vmem:[#allocation2 + $0xf0] sm:$0xff]
    %v1726 = vld [vmem:[#allocation2 + $0xf8] sm:$0xff]
    %1727 = vmatprep.subr.mxu0 %v446
    %1728 = vmatpush1.msra.mxu0 %v445
    %1729 = vmatprep.subr.mxu0 %v450
    %1730 = vmatpush1.msra.mxu0 %v449
    %1731 = vmatprep.subr.mxu0 %v454
    %1732 = vmatpush1.msra.mxu0 %v453
    %1733 = vmatprep.subr.mxu0 %v458
    %1734 = vmatpush1.msra.mxu0 %v457
    %1735 = vmatprep.subr.mxu0 %v462
    %1736 = vmatpush1.msra.mxu0 %v461
    %1737 = vmatprep.subr.mxu0 %v466
    %1738 = vmatpush1.msra.mxu0 %v465
    %1739 = vmatprep.subr.mxu0 %v470
    %1740 = vmatpush1.msra.mxu0 %v469
    %1741 = vmatprep.subr.mxu0 %v474
    %1742 = vmatpush1.msra.mxu0 %v473
    %1743 = vmatprep.subr.mxu0 %v478
    %1744 = vmatpush1.msra.mxu0 %v477
    %1745 = vmatprep.subr.mxu0 %v482
    %1746 = vmatpush1.msra.mxu0 %v481
    %1747 = vmatprep.subr.mxu0 %v486
    %1748 = vmatpush1.msra.mxu0 %v485
    %1749 = vmatprep.subr.mxu0 %v490
    %1750 = vmatpush1.msra.mxu0 %v489
    %1751 = vmatprep.subr.mxu0 %v494
    %1752 = vmatpush1.msra.mxu0 %v493
    %1753 = vmatprep.subr.mxu0 %v498
    %1754 = vmatpush1.msra.mxu0 %v497
    %1755 = vmatprep.subr.mxu0 %v502
    %1756 = vmatpush1.msra.mxu0 %v501
    %1757 = vmatprep.subr.mxu0 %v506
    %1758 = vmatpush1.msra.mxu0 %v505
    %1759 = vmatprep.subr.mxu0 0.0
    %1760 = vmatpush1.msra.mxu0 0.0
    %1761 = vmatprep.subr.mxu0 0.0
    %1762 = vmatpush1.msra.mxu0 0.0
    %1763 = vmatprep.subr.mxu0 0.0
    %1764 = vmatpush1.msra.mxu0 0.0
    %1765 = vmatprep.subr.mxu0 0.0
    %1766 = vmatpush1.msra.mxu0 0.0
    %1767 = vmatprep.subr.mxu0 0.0
    %1768 = vmatpush1.msra.mxu0 0.0
    %1769 = vmatprep.subr.mxu0 0.0
    %1770 = vmatpush1.msra.mxu0 0.0
    %1771 = vmatprep.subr.mxu0 0.0
    %1772 = vmatpush1.msra.mxu0 0.0
    %1773 = vmatprep.subr.mxu0 0.0
    %1774 = vmatpush1.msra.mxu0 0.0
    %1775 = vmatprep.subr.mxu0 0.0
    %1776 = vmatpush1.msra.mxu0 0.0
    %1777 = vmatprep.subr.mxu0 0.0
    %1778 = vmatpush1.msra.mxu0 0.0
    %1779 = vmatprep.subr.mxu0 0.0
    %1780 = vmatpush1.msra.mxu0 0.0
    %1781 = vmatprep.subr.mxu0 0.0
    %1782 = vmatpush1.msra.mxu0 0.0
    %1783 = vmatprep.subr.mxu0 0.0
    %1784 = vmatpush1.msra.mxu0 0.0
    %1785 = vmatprep.subr.mxu0 0.0
    %1786 = vmatpush1.msra.mxu0 0.0
    %1787 = vmatprep.subr.mxu0 0.0
    %1788 = vmatpush1.msra.mxu0 0.0
    %1789 = vmatprep.subr.mxu0 0.0
    %1790 = vmatpush1.msra.mxu0 0.0
    %1791 = vmatprep.mubr.f32.mxu0 0.0
    %1792 = vmatmul.mubr.f32.gmra.mrb[0].mxu0 %v1722
    %v1793 = vpop.f32.mrb[0].mxu0
    %v1794 = vadd.f32 0.0, %v1793
    %v1795 = vpop.f32.mrb[0].mxu0
    %v1796 = vadd.f32 0.0, %v1795
    %1797 = vdwg.mxu0
    %1798 = vmatprep.subr.mxu0 %v448
    %1799 = vmatpush1.msra.mxu0 %v447
    %1800 = vmatprep.subr.mxu0 %v452
    %1801 = vmatpush1.msra.mxu0 %v451
    %1802 = vmatprep.subr.mxu0 %v456
    %1803 = vmatpush1.msra.mxu0 %v455
    %1804 = vmatprep.subr.mxu0 %v460
    %1805 = vmatpush1.msra.mxu0 %v459
    %1806 = vmatprep.subr.mxu0 %v464
    %1807 = vmatpush1.msra.mxu0 %v463
    %1808 = vmatprep.subr.mxu0 %v468
    %1809 = vmatpush1.msra.mxu0 %v467
    %1810 = vmatprep.subr.mxu0 %v472
    %1811 = vmatpush1.msra.mxu0 %v471
    %1812 = vmatprep.subr.mxu0 %v476
    %1813 = vmatpush1.msra.mxu0 %v475
    %1814 = vmatprep.subr.mxu0 %v480
    %1815 = vmatpush1.msra.mxu0 %v479
    %1816 = vmatprep.subr.mxu0 %v484
    %1817 = vmatpush1.msra.mxu0 %v483
    %1818 = vmatprep.subr.mxu0 %v488
    %1819 = vmatpush1.msra.mxu0 %v487
    %1820 = vmatprep.subr.mxu0 %v492
    %1821 = vmatpush1.msra.mxu0 %v491
    %1822 = vmatprep.subr.mxu0 %v496
    %1823 = vmatpush1.msra.mxu0 %v495
    %1824 = vmatprep.subr.mxu0 %v500
    %1825 = vmatpush1.msra.mxu0 %v499
    %1826 = vmatprep.subr.mxu0 %v504
    %1827 = vmatpush1.msra.mxu0 %v503
    %1828 = vmatprep.subr.mxu0 %v508
    %1829 = vmatpush1.msra.mxu0 %v507
    %1830 = vmatprep.subr.mxu0 0.0
    %1831 = vmatpush1.msra.mxu0 0.0
    %1832 = vmatprep.subr.mxu0 0.0
    %1833 = vmatpush1.msra.mxu0 0.0
    %1834 = vmatprep.subr.mxu0 0.0
    %1835 = vmatpush1.msra.mxu0 0.0
    %1836 = vmatprep.subr.mxu0 0.0
    %1837 = vmatpush1.msra.mxu0 0.0
    %1838 = vmatprep.subr.mxu0 0.0
    %1839 = vmatpush1.msra.mxu0 0.0
    %1840 = vmatprep.subr.mxu0 0.0
    %1841 = vmatpush1.msra.mxu0 0.0
    %1842 = vmatprep.subr.mxu0 0.0
    %1843 = vmatpush1.msra.mxu0 0.0
    %1844 = vmatprep.subr.mxu0 0.0
    %1845 = vmatpush1.msra.mxu0 0.0
    %1846 = vmatprep.subr.mxu0 0.0
    %1847 = vmatpush1.msra.mxu0 0.0
    %1848 = vmatprep.subr.mxu0 0.0
    %1849 = vmatpush1.msra.mxu0 0.0
    %1850 = vmatprep.subr.mxu0 0.0
    %1851 = vmatpush1.msra.mxu0 0.0
    %1852 = vmatprep.subr.mxu0 0.0
    %1853 = vmatpush1.msra.mxu0 0.0
    %1854 = vmatprep.subr.mxu0 0.0
    %1855 = vmatpush1.msra.mxu0 0.0
    %1856 = vmatprep.subr.mxu0 0.0
    %1857 = vmatpush1.msra.mxu0 0.0
    %1858 = vmatprep.subr.mxu0 0.0
    %1859 = vmatpush1.msra.mxu0 0.0
    %1860 = vmatprep.subr.mxu0 0.0
    %1861 = vmatpush1.msra.mxu0 0.0
    %1862 = vmatprep.mubr.f32.mxu0 0.0
    %1863 = vmatmul.mubr.f32.gmra.mrb[0].mxu0 %v1722
    %v1864 = vpop.f32.mrb[0].mxu0
    %v1865 = vadd.f32 0.0, %v1864
    %v1866 = vpop.f32.mrb[0].mxu0
    %v1867 = vadd.f32 0.0, %v1866
    %1868 = vdwg.mxu0
    %v1869 = vadd.f32 %v1723, %v1794
    %v1870 = vadd.f32 %v1724, %v1796
    %v1871 = vadd.f32 %v1725, %v1865
    %v1872 = vadd.f32 %v1726, %v1867
    %v1873 = vxor.u32 %v1869, 2147483648
    %v1874 = vmul.f32 %v1873, 1.442695
    %v1875 = vpow.pop %v1874
    %v1876 = vadd.f32 %v1875, 1.0
    %v1877 = vrcp.pop %v1876
    %v1878 = vmul.f32 1.0, %v1877
    %v1879 = vxor.u32 %v1870, 2147483648
    %v1880 = vmul.f32 %v1879, 1.442695
    %v1881 = vpow.pop %v1880
    %v1882 = vadd.f32 %v1881, 1.0
    %v1883 = vrcp.pop %v1882
    %v1884 = vmul.f32 1.0, %v1883
    %v1885 = vtanh.pop %v1871
    %v1886 = vxor.u32 %v1872, 2147483648
    %v1887 = vmul.f32 %v1886, 1.442695
    %v1888 = vpow.pop %v1887
    %v1889 = vadd.f32 %v1888, 1.0
    %v1890 = vrcp.pop %v1889
    %v1891 = vmul.f32 1.0, %v1890
    %v1892 = vmul.f32 %v1884, %v1720
    %v1893 = vmul.f32 %v1878, %v1885
    %v1894 = vadd.f32 %v1892, %v1893
    %v1895 = vtanh.pop %v1894
    %v1896 = vmul.f32 %v1891, %v1895
    %v1897 = vld [vmem:[#allocation7] sm:$0xff]
    %v1898 = vld [vmem:[#allocation7 + $0x8] sm:$0xff]
    %v1899 = vld [vmem:[#allocation7 + $0x10] sm:$0xff]
    %v1900 = vld [vmem:[#allocation7 + $0x18] sm:$0xff]
    %v1901 = vld [vmem:[#allocation7 + $0x20] sm:$0xff]
    %v1902 = vld [vmem:[#allocation7 + $0x28] sm:$0xff]
    %v1903 = vld [vmem:[#allocation7 + $0x30] sm:$0xff]
    %v1904 = vld [vmem:[#allocation7 + $0x38] sm:$0xff]
    %v1905 = vld [vmem:[#allocation7 + $0x40] sm:$0xff]
    %v1906 = vld [vmem:[#allocation7 + $0x48] sm:$0xff]
    %v1907 = vld [vmem:[#allocation7 + $0x50] sm:$0xff]
    %v1908 = vld [vmem:[#allocation7 + $0x58] sm:$0xff]
    %v1909 = vld [vmem:[#allocation7 + $0x60] sm:$0xff]
    %v1910 = vld [vmem:[#allocation7 + $0x68] sm:$0xff]
    %v1911 = vld [vmem:[#allocation7 + $0x70] sm:$0xff]
    %v1912 = vld [vmem:[#allocation7 + $0x78] sm:$0xff]
    %v1913 = vld [vmem:[%s4] sm:$0x1]
    %v1915 = vlaneseq
    %v1916 = vshrl.u32 %v1915, 7
    %v1917 = vsub.s32 0, %v1916
    %v1918 = vrot.slane %v1913, %v1917
    %1920 = vmatprep.subr.mxu0 0.0
    %1921 = vmatpush1.msra.mxu0 %v1897
    %1922 = vmatprep.subr.mxu0 0.0
    %1923 = vmatpush1.msra.mxu0 %v1898
    %1924 = vmatprep.subr.mxu0 0.0
    %1925 = vmatpush1.msra.mxu0 %v1899
    %1926 = vmatprep.subr.mxu0 0.0
    %1927 = vmatpush1.msra.mxu0 %v1900
    %1928 = vmatprep.subr.mxu0 0.0
    %1929 = vmatpush1.msra.mxu0 %v1901
    %1930 = vmatprep.subr.mxu0 0.0
    %1931 = vmatpush1.msra.mxu0 %v1902
    %1932 = vmatprep.subr.mxu0 0.0
    %1933 = vmatpush1.msra.mxu0 %v1903
    %1934 = vmatprep.subr.mxu0 0.0
    %1935 = vmatpush1.msra.mxu0 %v1904
    %1936 = vmatprep.subr.mxu0 0.0
    %1937 = vmatpush1.msra.mxu0 %v1905
    %1938 = vmatprep.subr.mxu0 0.0
    %1939 = vmatpush1.msra.mxu0 %v1906
    %1940 = vmatprep.subr.mxu0 0.0
    %1941 = vmatpush1.msra.mxu0 %v1907
    %1942 = vmatprep.subr.mxu0 0.0
    %1943 = vmatpush1.msra.mxu0 %v1908
    %1944 = vmatprep.subr.mxu0 0.0
    %1945 = vmatpush1.msra.mxu0 %v1909
    %1946 = vmatprep.subr.mxu0 0.0
    %1947 = vmatpush1.msra.mxu0 %v1910
    %1948 = vmatprep.subr.mxu0 0.0
    %1949 = vmatpush1.msra.mxu0 %v1911
    %1950 = vmatprep.subr.mxu0 0.0
    %1951 = vmatpush1.msra.mxu0 %v1912
    %1952 = vmatprep.subr.mxu0 0.0
    %1953 = vmatpush1.msra.mxu0 0.0
    %1954 = vmatprep.subr.mxu0 0.0
    %1955 = vmatpush1.msra.mxu0 0.0
    %1956 = vmatprep.subr.mxu0 0.0
    %1957 = vmatpush1.msra.mxu0 0.0
    %1958 = vmatprep.subr.mxu0 0.0
    %1959 = vmatpush1.msra.mxu0 0.0
    %1960 = vmatprep.subr.mxu0 0.0
    %1961 = vmatpush1.msra.mxu0 0.0
    %1962 = vmatprep.subr.mxu0 0.0
    %1963 = vmatpush1.msra.mxu0 0.0
    %1964 = vmatprep.subr.mxu0 0.0
    %1965 = vmatpush1.msra.mxu0 0.0
    %1966 = vmatprep.subr.mxu0 0.0
    %1967 = vmatpush1.msra.mxu0 0.0
    %1968 = vmatprep.subr.mxu0 0.0
    %1969 = vmatpush1.msra.mxu0 0.0
    %1970 = vmatprep.subr.mxu0 0.0
    %1971 = vmatpush1.msra.mxu0 0.0
    %1972 = vmatprep.subr.mxu0 0.0
    %1973 = vmatpush1.msra.mxu0 0.0
    %1974 = vmatprep.subr.mxu0 0.0
    %1975 = vmatpush1.msra.mxu0 0.0
    %1976 = vmatprep.subr.mxu0 0.0
    %1977 = vmatpush1.msra.mxu0 0.0
    %1978 = vmatprep.subr.mxu0 0.0
    %1979 = vmatpush1.msra.mxu0 0.0
    %1980 = vmatprep.subr.mxu0 0.0
    %1981 = vmatpush1.msra.mxu0 0.0
    %1982 = vmatprep.subr.mxu0 0.0
    %1983 = vmatpush1.msra.mxu0 0.0
    %1984 = vmatprep.mubr.f32.mxu0 0.0
    %1985 = vmatmul.mubr.f32.gmra.mrb[0].mxu0 %v1896
    %v1986 = vpop.f32.mrb[0].mxu0
    %v1987 = vadd.f32 %v1918, %v1986
    %v1988 = vpop.f32.mrb[0].mxu0
    %1989 = vdwg.mxu0
    %1990 = vst [vmem:[%s5] sm:$0xff] %v1987
    // Predicated region
    $region34: #{lang_model_forward.1} parent=1 // pred_check
      _
    $region35: #{lang_model_forward.1} parent=1 // pred_check_branch
      %1992 = sbr.rel (0) target = $region37
    $region36: #{lang_model_forward.1} parent=1 // pred_region
      _
    $region37: #{lang_model_forward.1} parent=1 // pred_fallthru
      _
    // Predicated region
    $region38: #{lang_model_forward.1} parent=1 // pred_check
      _
    $region39: #{lang_model_forward.1} parent=1 // pred_check_branch
      %1994 = sbr.rel (0) target = $region41
    $region40: #{lang_model_forward.1} parent=1 // pred_region
      _
    $region41: #{lang_model_forward.1} parent=1 // pred_fallthru
      _
    %1995 = vsyncpa [#allocation4], 1
    %1996 = vsyncpa [#allocation6], 1

</llo_original>
